<compile_context>
chip_gen: v6e
topology: v6e:2x2x1
jax: 0.10.0
libtpu: 0.0.40
codegen_flags: <defaults>
</compile_context>

<pallas_src>
import functools

import jax
import jax.numpy as jnp
from jax import lax
from jax.experimental import pallas as pl
from jax.experimental.pallas import tpu as pltpu


def _round_up(x, m):
    return (x + m - 1) // m * m


# ---------------------------------------------------------------------------
# Setup (outside the hot path): fuse biases into the embedding tables.
# ---------------------------------------------------------------------------
def prepare_mf_bias_tables(user_emb, item_emb, user_bias, item_bias, *,
                           resident_vmem_budget_bytes=12 * 1024 * 1024):
    """Builds fused [emb | bias | 1] tables and decides VMEM residency."""
    nu, e = user_emb.shape
    ni, _ = item_emb.shape
    ep = _round_up(e + 2, 8)  # fused row length, padded to the sublane tile

    user_tab = jnp.zeros((nu, ep), jnp.float32)
    user_tab = user_tab.at[:, :e].set(user_emb.astype(jnp.float32))
    user_tab = user_tab.at[:, e].set(user_bias[:, 0].astype(jnp.float32))
    user_tab = user_tab.at[:, e + 1].set(1.0)

    item_tab = jnp.zeros((ni, ep), jnp.float32)
    item_tab = item_tab.at[:, :e].set(item_emb.astype(jnp.float32))
    item_tab = item_tab.at[:, e].set(1.0)
    item_tab = item_tab.at[:, e + 1].set(item_bias[:, 0].astype(jnp.float32))

    nu_pad = _round_up(nu, 128)
    ni_pad = _round_up(ni, 128)
    resident_bytes = (nu_pad + ni_pad) * ep * 4
    if resident_bytes <= resident_vmem_budget_bytes:
        # Transposed layout: (ep, vocab_pad) so the one-hot gather and the
        # final reduction are both plain NN matmuls / sublane reductions and
        # every intermediate keeps the sample index on the lanes.
        user_tab_t = jnp.zeros((ep, nu_pad), jnp.float32).at[:, :nu].set(user_tab.T)
        item_tab_t = jnp.zeros((ep, ni_pad), jnp.float32).at[:, :ni].set(item_tab.T)
        return {"resident": True, "user_tab_t": user_tab_t,
                "item_tab_t": item_tab_t, "emb_plus": ep}
    return {"resident": False, "user_tab": user_tab, "item_tab": item_tab,
            "emb_plus": ep}


# ---------------------------------------------------------------------------
# Fast path: tables resident in VMEM, MXU one-hot gather, lane-dense output.
# ---------------------------------------------------------------------------
def _mf_bias_resident_kernel(u_idx_ref, v_idx_ref,            # (1,1,bb) int32
                             user_tab_t_ref, item_tab_t_ref,  # (ep, vocab_pad)
                             out_ref):                        # (1,1,bb) f32
    u_ids = u_idx_ref[0]                    # (1, bb) int32, sample idx on lanes
    v_ids = v_idx_ref[0]
    bb = u_ids.shape[1]
    nu = user_tab_t_ref.shape[1]
    ni = item_tab_t_ref.shape[1]

    # One-hot selectors: oh[n, b] = (n == idx[b]).
    oh_u = jnp.where(
        lax.broadcasted_iota(jnp.int32, (nu, bb), 0) == u_ids, 1.0, 0.0
    ).astype(jnp.float32)
    oh_v = jnp.where(
        lax.broadcasted_iota(jnp.int32, (ni, bb), 0) == v_ids, 1.0, 0.0
    ).astype(jnp.float32)

    # MXU gather of the fused rows, already transposed: (ep, bb).
    u_rows_t = jnp.dot(user_tab_t_ref[...], oh_u,
                       preferred_element_type=jnp.float32,
                       precision=lax.Precision.HIGHEST)
    v_rows_t = jnp.dot(item_tab_t_ref[...], oh_v,
                       preferred_element_type=jnp.float32,
                       precision=lax.Precision.HIGHEST)

    # Fused dot == emb dot + b_u + b_v (bias columns were folded in).
    out_ref[0] = jnp.sum(u_rows_t * v_rows_t, axis=0, keepdims=True)  # (1, bb)


# ---------------------------------------------------------------------------
# Fallback: tables in HBM, per-row DMA gather double-buffered across grid steps.
# ---------------------------------------------------------------------------
def _mf_bias_hbm_kernel(block_b,
                        u_idx_ref, v_idx_ref,            # scalar prefetch (SMEM)
                        user_tab_hbm, item_tab_hbm,      # fused tables in HBM
                        out_ref,                         # (block_b, 1) block
                        u_rows, v_rows,                  # (2, block_b, ep) VMEM
                        sems):                           # DMA sems (2 slots, 2 tables)
    g = pl.program_id(0)
    ng = pl.num_programs(0)

    def issue(step, slot):
        base = step * block_b
        # All SMEM index reads happen here, before any semaphore wait.
        for r in range(block_b):
            ui = u_idx_ref[base + r]
            vi = v_idx_ref[base + r]
            pltpu.make_async_copy(user_tab_hbm.at[ui], u_rows.at[slot, r],
                                  sems.at[slot, 0]).start()
            pltpu.make_async_copy(item_tab_hbm.at[vi], v_rows.at[slot, r],
                                  sems.at[slot, 1]).start()

    def wait_slot(slot):
        for r in range(block_b):
            pltpu.make_async_copy(user_tab_hbm.at[0], u_rows.at[slot, r],
                                  sems.at[slot, 0]).wait()
            pltpu.make_async_copy(item_tab_hbm.at[0], v_rows.at[slot, r],
                                  sems.at[slot, 1]).wait()

    cur = lax.rem(g, 2)

    @pl.when(g == 0)
    def _():
        issue(0, 0)                          # prime the pipeline

    @pl.when(g + 1 < ng)
    def _():
        issue(g + 1, lax.rem(g + 1, 2))      # keep next tile's gathers in flight

    wait_slot(cur)

    w = u_rows[cur] * v_rows[cur]            # (block_b, ep) fused rows
    out_ref[...] = jnp.sum(w, axis=1, keepdims=True)


# ---------------------------------------------------------------------------
# Wrapper
# ---------------------------------------------------------------------------
def mf_bias_forward(u, v, tables, *, block_b=128, vmem_limit_bytes=None):
    """Pallas TPU forward of MF_bias. u, v: (B,) int; returns (B,) float32."""
    B = u.shape[0]
    block_b = max(8, min(_round_up(block_b, 8), _round_up(B, 8)))
    grid = pl.cdiv(B, block_b)
    b_pad = grid * block_b

    u_idx = jnp.zeros((b_pad,), jnp.int32).at[:B].set(u.astype(jnp.int32).reshape(B))
    v_idx = jnp.zeros((b_pad,), jnp.int32).at[:B].set(v.astype(jnp.int32).reshape(B))

    cp_extra = {}
    if vmem_limit_bytes is not None:
        cp_extra["vmem_limit_bytes"] = int(vmem_limit_bytes)

    if tables["resident"]:
        ut = tables["user_tab_t"]
        it = tables["item_tab_t"]
        u3 = u_idx.reshape(grid, 1, block_b)
        v3 = v_idx.reshape(grid, 1, block_b)
        out = pl.pallas_call(
            _mf_bias_resident_kernel,
            out_shape=jax.ShapeDtypeStruct((grid, 1, block_b), jnp.float32),
            grid=(grid,),
            in_specs=[
                pl.BlockSpec((1, 1, block_b), lambda g: (g, 0, 0)),
                pl.BlockSpec((1, 1, block_b), lambda g: (g, 0, 0)),
                pl.BlockSpec(ut.shape, lambda g: (0, 0)),  # resident across grid
                pl.BlockSpec(it.shape, lambda g: (0, 0)),  # resident across grid
            ],
            out_specs=pl.BlockSpec((1, 1, block_b), lambda g: (g, 0, 0)),
            compiler_params=pltpu.CompilerParams(
                dimension_semantics=("parallel",), **cp_extra),
        )(u3, v3, ut, it)
        return out.reshape(b_pad)[:B]

    # --- HBM fallback (tables too large to keep resident in VMEM) ---
    ut = tables["user_tab"]
    it = tables["item_tab"]
    ep = tables["emb_plus"]
    kernel = functools.partial(_mf_bias_hbm_kernel, block_b)
    grid_spec = pltpu.PrefetchScalarGridSpec(
        num_scalar_prefetch=2,
        grid=(grid,),
        in_specs=[pl.BlockSpec(memory_space=pl.ANY),
                  pl.BlockSpec(memory_space=pl.ANY)],
        out_specs=pl.BlockSpec((block_b, 1), lambda g, u_ref, v_ref: (g, 0)),
        scratch_shapes=[
            pltpu.VMEM((2, block_b, ep), jnp.float32),
            pltpu.VMEM((2, block_b, ep), jnp.float32),
            pltpu.SemaphoreType.DMA((2, 2)),
        ],
    )
    out = pl.pallas_call(
        kernel,
        out_shape=jax.ShapeDtypeStruct((b_pad, 1), jnp.float32),
        grid_spec=grid_spec,
        compiler_params=pltpu.CompilerParams(
            # NOT "parallel": the cross-step double-buffered gather carries
            # semaphore / scratch-slot state across grid iterations.
            dimension_semantics=("arbitrary",), **cp_extra),
    )(u_idx, v_idx, ut, it)
    return out[:B, 0]


def mf_bias_reference(u, v, user_emb, item_emb, user_bias, item_bias):
    U = jnp.take(user_emb, u, axis=0)
    V = jnp.take(item_emb, v, axis=0)
    b_u = jnp.take(user_bias, u, axis=0)[:, 0]
    b_v = jnp.take(item_bias, v, axis=0)[:, 0]
    return jnp.sum(U * V, axis=1) + b_u + b_v


if __name__ == "__main__":
    # Small deterministic setup consistent with MF_bias.__init__.
    num_users, num_items, emb_size = 40, 24, 32

    key = jax.random.PRNGKey(0)
    k_ue, k_ie, k_ub, k_ib, k_u, k_v = jax.random.split(key, 6)

    # uniform_(0, 0.05) for embeddings, uniform_(-0.01, 0.01) for biases.
    user_emb = jax.random.uniform(k_ue, (num_users, emb_size), jnp.float32, 0.0, 0.05)
    item_emb = jax.random.uniform(k_ie, (num_items, emb_size), jnp.float32, 0.0, 0.05)
    user_bias = jax.random.uniform(k_ub, (num_users, 1), jnp.float32, -0.01, 0.01)
    item_bias = jax.random.uniform(k_ib, (num_items, 1), jnp.float32, -0.01, 0.01)

    tables = prepare_mf_bias_tables(user_emb, item_emb, user_bias, item_bias)
    assert tables["resident"]  # demo-sized tables take the resident fast path

    # batch=256 with block_b=128 -> a 2-step grid (one tile per v7x TensorCore).
    batch = 256
    u = jax.random.randint(k_u, (batch,), 0, num_users, jnp.int32)
    v = jax.random.randint(k_v, (batch,), 0, num_items, jnp.int32)

    out = jax.block_until_ready(mf_bias_forward(u, v, tables, block_b=128))
    ref = mf_bias_reference(u, v, user_emb, item_emb, user_bias, item_bias)
    assert out.shape == (batch,)
    assert jnp.allclose(out, ref, atol=5e-4, rtol=1e-3), (out, ref)

    # Ragged batch (pads internally to a multiple of block_b, then slices).
    batch2 = 100
    u2 = jax.random.randint(jax.random.PRNGKey(1), (batch2,), 0, num_users, jnp.int32)
    v2 = jax.random.randint(jax.random.PRNGKey(2), (batch2,), 0, num_items, jnp.int32)
    out2 = jax.block_until_ready(mf_bias_forward(u2, v2, tables, block_b=128))
    ref2 = mf_bias_reference(u2, v2, user_emb, item_emb, user_bias, item_bias)
    assert out2.shape == (batch2,)
    assert jnp.allclose(out2, ref2, atol=5e-4, rtol=1e-3), (out2, ref2)

    print("KERNEL_OK")
</pallas_src>

<mosaic_0001>
module attributes {stable_mosaic.version = 11 : i64} {
  func.func @_mf_bias_resident_kernel(%arg0: i32, %arg1: memref<1x1x128xi32, #tpu.memory_space<vmem>>, %arg2: memref<1x1x128xi32, #tpu.memory_space<vmem>>, %arg3: memref<40x128xf32, #tpu.memory_space<vmem>>, %arg4: memref<40x128xf32, #tpu.memory_space<vmem>>, %arg5: memref<1x1x128xf32, #tpu.memory_space<vmem>>) attributes {dimension_semantics = [#tpu.dimension_semantics<parallel>], iteration_bounds = array<i64: 2>, scalar_prefetch = 0 : i64, scratch_operands = 0 : i64, tpu.core_type = #tpu.core_type<tc>, window_params = [{transform_indices = @transform_0, window_bounds = array<i64: 1, 1, 128>}, {transform_indices = @transform_1, window_bounds = array<i64: 1, 1, 128>}, {pipeline_mode = #tpu.pipeline_mode<synchronous>, transform_indices = @transform_2, window_bounds = array<i64: 40, 128>}, {pipeline_mode = #tpu.pipeline_mode<synchronous>, transform_indices = @transform_3, window_bounds = array<i64: 40, 128>}, {transform_indices = @transform_4, window_bounds = array<i64: 1, 1, 128>}]} {
    %c0 = arith.constant 0 : index
    %c0_0 = arith.constant 0 : index
    %c0_1 = arith.constant 0 : index
    %0 = vector.load %arg1[%c0, %c0_0, %c0_1] : memref<1x1x128xi32, #tpu.memory_space<vmem>>, vector<1x1x128xi32>
    %1 = vector.shape_cast %0 : vector<1x1x128xi32> to vector<1x128xi32>
    %c0_2 = arith.constant 0 : index
    %c0_3 = arith.constant 0 : index
    %c0_4 = arith.constant 0 : index
    %2 = vector.load %arg2[%c0_2, %c0_3, %c0_4] : memref<1x1x128xi32, #tpu.memory_space<vmem>>, vector<1x1x128xi32>
    %3 = vector.shape_cast %2 : vector<1x1x128xi32> to vector<1x128xi32>
    %4 = tpu.iota {dimensions = array<i32: 0>} : vector<128x128xi32>
    %5 = vector.broadcast %1 : vector<1x128xi32> to vector<128x128xi32>
    %6 = arith.cmpi eq, %4, %5 : vector<128x128xi32>
    %cst = arith.constant 1.000000e+00 : f32
    %cst_5 = arith.constant 0.000000e+00 : f32
    %7 = vector.broadcast %cst : f32 to vector<128x128xf32>
    %8 = vector.broadcast %cst_5 : f32 to vector<128x128xf32>
    %9 = arith.select %6, %7, %8 : vector<128x128xi1>, vector<128x128xf32>
    %10 = tpu.iota {dimensions = array<i32: 0>} : vector<128x128xi32>
    %11 = vector.broadcast %3 : vector<1x128xi32> to vector<128x128xi32>
    %12 = arith.cmpi eq, %10, %11 : vector<128x128xi32>
    %cst_6 = arith.constant 1.000000e+00 : f32
    %cst_7 = arith.constant 0.000000e+00 : f32
    %13 = vector.broadcast %cst_6 : f32 to vector<128x128xf32>
    %14 = vector.broadcast %cst_7 : f32 to vector<128x128xf32>
    %15 = arith.select %12, %13, %14 : vector<128x128xi1>, vector<128x128xf32>
    %c0_8 = arith.constant 0 : index
    %c0_9 = arith.constant 0 : index
    %16 = vector.load %arg3[%c0_8, %c0_9] : memref<40x128xf32, #tpu.memory_space<vmem>>, vector<40x128xf32>
    %cst_10 = arith.constant dense<0.000000e+00> : vector<40x128xf32>
    %17 = tpu.matmul %16, %9, %cst_10 {dimension_numbers = #tpu.dot_dimension_numbers<[1], [0], [0], [1], [0, 0, 1, 1], [], []>, precision = #tpu.contract_precision<fp32>} : vector<40x128xf32>, vector<128x128xf32>, vector<40x128xf32> -> vector<40x128xf32>
    %c0_11 = arith.constant 0 : index
    %c0_12 = arith.constant 0 : index
    %18 = vector.load %arg4[%c0_11, %c0_12] : memref<40x128xf32, #tpu.memory_space<vmem>>, vector<40x128xf32>
    %cst_13 = arith.constant dense<0.000000e+00> : vector<40x128xf32>
    %19 = tpu.matmul %18, %15, %cst_13 {dimension_numbers = #tpu.dot_dimension_numbers<[1], [0], [0], [1], [0, 0, 1, 1], [], []>, precision = #tpu.contract_precision<fp32>} : vector<40x128xf32>, vector<128x128xf32>, vector<40x128xf32> -> vector<40x128xf32>
    %20 = arith.mulf %17, %19 : vector<40x128xf32>
    %cst_14 = arith.constant dense<0.000000e+00> : vector<128xf32>
    %21 = vector.multi_reduction <add>, %20, %cst_14 [0] : vector<40x128xf32> to vector<128xf32>
    %22 = vector.shape_cast %21 : vector<128xf32> to vector<1x128xf32>
    %c0_15 = arith.constant 0 : index
    %c0_16 = arith.constant 0 : index
    %c0_17 = arith.constant 0 : index
    %23 = vector.load %arg5[%c0_15, %c0_16, %c0_17] : memref<1x1x128xf32, #tpu.memory_space<vmem>>, vector<1x1x128xf32>
    %24 = vector.shape_cast %23 : vector<1x1x128xf32> to vector<1x128xf32>
    %25 = vector.shape_cast %22 : vector<1x128xf32> to vector<1x1x128xf32>
    tpu.vector_store %arg5[%c0_15, %c0_16, %c0_17], %25 {strides = array<i32>} : memref<1x1x128xf32, #tpu.memory_space<vmem>>, vector<1x1x128xf32>,
    return
  }
  func.func @transform_0(%arg0: i32) -> (i32, i32, i32) {
    %c0_i32 = arith.constant 0 : i32
    %c0_i32_0 = arith.constant 0 : i32
    %c0_i32_1 = arith.constant 0 : i32
    return %arg0, %c0_i32, %c0_i32_0 : i32, i32, i32
  }
  func.func @transform_1(%arg0: i32) -> (i32, i32, i32) {
    %c0_i32 = arith.constant 0 : i32
    %c0_i32_0 = arith.constant 0 : i32
    %c0_i32_1 = arith.constant 0 : i32
    return %arg0, %c0_i32, %c0_i32_0 : i32, i32, i32
  }
  func.func @transform_2(%arg0: i32) -> (i32, i32) {
    %c0_i32 = arith.constant 0 : i32
    %c0_i32_0 = arith.constant 0 : i32
    %c0_i32_1 = arith.constant 0 : i32
    return %c0_i32, %c0_i32_0 : i32, i32
  }
  func.func @transform_3(%arg0: i32) -> (i32, i32) {
    %c0_i32 = arith.constant 0 : i32
    %c0_i32_0 = arith.constant 0 : i32
    %c0_i32_1 = arith.constant 0 : i32
    return %c0_i32, %c0_i32_0 : i32, i32
  }
  func.func @transform_4(%arg0: i32) -> (i32, i32, i32) {
    %c0_i32 = arith.constant 0 : i32
    %c0_i32_0 = arith.constant 0 : i32
    %c0_i32_1 = arith.constant 0 : i32
    return %arg0, %c0_i32, %c0_i32_0 : i32, i32, i32
  }
}

</mosaic_0001>

<llo_original>
// kernel: tpu_custom_call.1
$region0: #{tpu_custom_call.1}
  #allocation0 [shape = 'u32[]', space=smem, size = 0x4, offset = 0x4, fixed_abs, tag = 'smem constant byte address 0x4 - core index']
  #allocation1 [shape = 'u32[144,128]{1,0:T(1,128)}', space=vmem, size = 0x12000, scoped, tag = 'internal scratch']
  %s0 = inlined_call_operand.hbm [shape: s32[2,1,128], index: 0, kind: input, shape index: {}]
  %s1 = inlined_call_operand.hbm [shape: s32[2,1,128], index: 1, kind: input, shape index: {}]
  %s2 = inlined_call_operand.hbm [shape: f32[40,128], index: 2, kind: input, shape index: {}]
  %s3 = inlined_call_operand.hbm [shape: f32[40,128], index: 3, kind: input, shape index: {}]
  %s4 = inlined_call_operand.hbm [shape: f32[2,1,128], index: 4, kind: output, shape index: {}]
  %s5 = sld [smem:[#allocation0]]
  $region65: #{tpu_custom_call.1} parent=0
    _
  %s7 = ssub.s32 1, %s5
  %s8 = scalar_select 0, %s7, %s5
  $region1: #{tpu_custom_call.1} parent=0
    #allocation2 [shape = 'u8[1024]{0}', space=vmem, size = 0x400, scoped, tag = 'input window, operand 0']
    #allocation3 [shape = 's32[2]{0}', space=sflag, size = 0x8, scoped, tag = 'scoped memory for tpu_custom_call.1']
    #allocation4 [shape = 's32[2]{0}', space=sflag, size = 0x8, scoped, tag = 'scoped memory for tpu_custom_call.1']
    #allocation5 [shape = 'u8[1024]{0}', space=vmem, size = 0x400, scoped, tag = 'input window, operand 1']
    #allocation6 [shape = 's32[2]{0}', space=sflag, size = 0x8, scoped, tag = 'scoped memory for tpu_custom_call.1']
    #allocation7 [shape = 'u8[20480]{0}', space=vmem, size = 0x5000, scoped, tag = 'input window, operand 2, single buffered']
    #allocation8 [shape = 'u8[20480]{0}', space=vmem, size = 0x5000, scoped, tag = 'input window, operand 3, single buffered']
    #allocation9 [shape = 's32[1]{0}', space=sflag, size = 0x4, scoped, tag = 'scoped memory for tpu_custom_call.1']
    #allocation10 [shape = 'u8[1024]{0}', space=vmem, size = 0x400, scoped, tag = 'output window, operand 0']
    %9 = vsyncpa [#allocation3], 0
    %s10 = scalar_lea.sflag [#allocation3], 1
    %11 = vsyncpa %s10, 0
    %12 = vsyncpa [#allocation6], 0
    %s13 = scalar_lea.sflag [#allocation6], 1
    %14 = vsyncpa %s13, 0
    %15 = vsyncpa [#allocation9], 0
    %16 = vsyncpa [#allocation4], 0
    %s17 = scalar_lea.sflag [#allocation4], 1
    %18 = vsyncpa %s17, 0
    loop: start=0, step=1, limit=4
    $region2: #{tpu_custom_call.1} parent=1 // loop_pre_header
      _
    $region3: #{tpu_custom_call.1} parent=1 // loop_header
      %s20 = sphi 0, %s24
      %p21 = scmp.ge.s32.totalorder %s20, 4
      %s30 = sphi 0, %s32
      %s33 = sphi 0, %s30
      %s34 = sphi 0, %s33
      %s50 = sphi 0, %s34
      %s56 = sphi 0, %s58
      %s59 = sphi 0, %s56
      %s60 = sphi 0, %s59
      %s76 = sphi 0, %s60
      %s80 = sphi 0, %s80
      %s82 = sphi 0, %s80
      %s83 = sphi 0, %s82
      %s97 = sphi 0, %s83
      %s101 = sphi 0, %s101
      %s103 = sphi 0, %s101
      %s104 = sphi 0, %s103
      %s118 = sphi 0, %s104
      %s124 = sphi 0, %s126
      %s127 = sphi 0, %s124
      %s128 = sphi 0, %s127
      %s144 = sphi 0, %s128
    $region4: #{tpu_custom_call.1} parent=1 // loop_header_branch
      %23 = sbr.rel (%p21) target = $region8
    $region5: #{tpu_custom_call.1} parent=1 // loop_body
      %s25 = ssub.s32 %s20, 1
      %s26 = ssub.s32 %s20, 2
      %s27 = sadd.s32 %s20, 1
      %s28 = ssub.s32 %s20, %s27
      %p29 = scmp.eq.s32.totalorder %s28, 0
      %s31 = sadd.s32 %s30, 1
      %s32 = scalar_select %p29, %s30, %s31
      %p35 = pneg %p29
      %p36 = scmp.eq.s32.totalorder %s20, 1
      %p37 = por %p35, %p36
      %p38 = scmp.ne.s32.totalorder %s30, %s33
      %p39 = scmp.eq.s32.totalorder %s20, 0
      %p40 = por %p38, %p39
      %p41 = scmp.ne.s32.totalorder %s30, %s33
      %p42 = scmp.eq.s32.totalorder %s25, 1
      %p43 = por %p41, %p42
      %p44 = scmp.ne.s32.totalorder %s33, %s34
      %p45 = scmp.eq.s32.totalorder %s25, 0
      %p46 = por %p44, %p45
      %p47 = scmp.ne.s32.totalorder %s33, %s34
      %p48 = scmp.eq.s32.totalorder %s26, 1
      %p49 = por %p47, %p48
      %p51 = scmp.ne.s32.totalorder %s34, %s50
      %p52 = scmp.eq.s32.totalorder %s26, 0
      %p53 = por %p51, %p52
      %s54 = ssub.s32 %s20, %s27
      %p55 = scmp.eq.s32.totalorder %s54, 0
      %s57 = sadd.s32 %s56, 1
      %s58 = scalar_select %p55, %s56, %s57
      %p61 = pneg %p55
      %p62 = scmp.eq.s32.totalorder %s20, 1
      %p63 = por %p61, %p62
      %p64 = scmp.ne.s32.totalorder %s56, %s59
      %p65 = scmp.eq.s32.totalorder %s20, 0
      %p66 = por %p64, %p65
      %p67 = scmp.ne.s32.totalorder %s56, %s59
      %p68 = scmp.eq.s32.totalorder %s25, 1
      %p69 = por %p67, %p68
      %p70 = scmp.ne.s32.totalorder %s59, %s60
      %p71 = scmp.eq.s32.totalorder %s25, 0
      %p72 = por %p70, %p71
      %p73 = scmp.ne.s32.totalorder %s59, %s60
      %p74 = scmp.eq.s32.totalorder %s26, 1
      %p75 = por %p73, %p74
      %p77 = scmp.ne.s32.totalorder %s60, %s76
      %p78 = scmp.eq.s32.totalorder %s26, 0
      %p79 = por %p77, %p78
      %s81 = sadd.s32 %s80, 1
      %p84 = scmp.eq.s32.totalorder %s20, 1
      %p85 = scmp.ne.s32.totalorder %s80, %s82
      %p86 = scmp.eq.s32.totalorder %s20, 0
      %p87 = por %p85, %p86
      %p88 = scmp.ne.s32.totalorder %s80, %s82
      %p89 = scmp.eq.s32.totalorder %s25, 1
      %p90 = por %p88, %p89
      %p91 = scmp.ne.s32.totalorder %s82, %s83
      %p92 = scmp.eq.s32.totalorder %s25, 0
      %p93 = por %p91, %p92
      %p94 = scmp.ne.s32.totalorder %s82, %s83
      %p95 = scmp.eq.s32.totalorder %s26, 1
      %p96 = por %p94, %p95
      %p98 = scmp.ne.s32.totalorder %s83, %s97
      %p99 = scmp.eq.s32.totalorder %s26, 0
      %p100 = por %p98, %p99
      %s102 = sadd.s32 %s101, 1
      %p105 = scmp.eq.s32.totalorder %s20, 1
      %p106 = scmp.ne.s32.totalorder %s101, %s103
      %p107 = scmp.eq.s32.totalorder %s20, 0
      %p108 = por %p106, %p107
      %p109 = scmp.ne.s32.totalorder %s101, %s103
      %p110 = scmp.eq.s32.totalorder %s25, 1
      %p111 = por %p109, %p110
      %p112 = scmp.ne.s32.totalorder %s103, %s104
      %p113 = scmp.eq.s32.totalorder %s25, 0
      %p114 = por %p112, %p113
      %p115 = scmp.ne.s32.totalorder %s103, %s104
      %p116 = scmp.eq.s32.totalorder %s26, 1
      %p117 = por %p115, %p116
      %p119 = scmp.ne.s32.totalorder %s104, %s118
      %p120 = scmp.eq.s32.totalorder %s26, 0
      %p121 = por %p119, %p120
      %s122 = ssub.s32 %s20, %s27
      %p123 = scmp.eq.s32.totalorder %s122, 0
      %s125 = sadd.s32 %s124, 1
      %s126 = scalar_select %p123, %s124, %s125
      %p129 = pneg %p123
      %p130 = scmp.eq.s32.totalorder %s20, 1
      %p131 = por %p129, %p130
      %p132 = scmp.ne.s32.totalorder %s124, %s127
      %p133 = scmp.eq.s32.totalorder %s20, 0
      %p134 = por %p132, %p133
      %p135 = scmp.ne.s32.totalorder %s124, %s127
      %p136 = scmp.eq.s32.totalorder %s25, 1
      %p137 = por %p135, %p136
      %p138 = scmp.ne.s32.totalorder %s127, %s128
      %p139 = scmp.eq.s32.totalorder %s25, 0
      %p140 = por %p138, %p139
      %p141 = scmp.ne.s32.totalorder %s127, %s128
      %p142 = scmp.eq.s32.totalorder %s26, 1
      %p143 = por %p141, %p142
      %p145 = scmp.ne.s32.totalorder %s128, %s144
      %p146 = scmp.eq.s32.totalorder %s26, 0
      %p147 = por %p145, %p146
      %p148 = scmp.le.s32.totalorder 1, %s20
      %p149 = scmp.lt.s32.totalorder %s20, 3
      %p150 = pnand %p148, %p149
      %p151 = pneg %p150
      // Predicated region
      $region9: #{tpu_custom_call.1} parent=5 // pred_check
        _
      $region10: #{tpu_custom_call.1} parent=5 // pred_check_branch
        %153 = sbr.rel (%p150) target = $region12
      $region11: #{tpu_custom_call.1} parent=5 // pred_region
        %s154 = ssub.s32 %s20, 1
        // Predicated region
        $region13: #{tpu_custom_call.1} parent=11 // pred_check
          %p155 = pneg %p93
        $region14: #{tpu_custom_call.1} parent=11 // pred_check_branch
          %157 = sbr.rel (%p155) target = $region16
        $region15: #{tpu_custom_call.1} parent=11 // pred_region
          %s159 = ssub.s32 640, 640
          %160 = vsyncadd [#allocation6], %s159
          %s161 = sshll.u32 [#allocation7], 4
          %s162 = int_to_ptr.vmem [resolvable:$true] %s161
          %167 = dma.hbm_to_vmem [thread:$0]  %s2, 640, %s162, [#allocation6], 128, 128, 8
        $region16: #{tpu_custom_call.1} parent=11 // pred_fallthru
          _
        // Predicated region
        $region17: #{tpu_custom_call.1} parent=11 // pred_check
          %p168 = pneg %p114
        $region18: #{tpu_custom_call.1} parent=11 // pred_check_branch
          %170 = sbr.rel (%p168) target = $region20
        $region19: #{tpu_custom_call.1} parent=11 // pred_region
          %s172 = ssub.s32 640, 640
          %173 = vsyncadd [#allocation9], %s172
          %s174 = sshll.u32 [#allocation8], 4
          %s175 = int_to_ptr.vmem [resolvable:$true] %s174
          %180 = dma.hbm_to_vmem [thread:$0]  %s3, 640, %s175, [#allocation9], 128, 128, 8
        $region20: #{tpu_custom_call.1} parent=11 // pred_fallthru
          _
      $region12: #{tpu_custom_call.1} parent=5 // pred_fallthru
        _
      %p181 = scmp.lt.s32.totalorder %s20, 2
      // Predicated region
      $region21: #{tpu_custom_call.1} parent=5 // pred_check
        %p182 = pneg %p181
      $region22: #{tpu_custom_call.1} parent=5 // pred_check_branch
        %184 = sbr.rel (%p182) target = $region24
      $region23: #{tpu_custom_call.1} parent=5 // pred_region
        // Predicated region
        $region25: #{tpu_custom_call.1} parent=23 // pred_check
          %p185 = pneg %p40
        $region26: #{tpu_custom_call.1} parent=23 // pred_check_branch
          %187 = sbr.rel (%p185) target = $region28
        $region27: #{tpu_custom_call.1} parent=23 // pred_region
          %s188 = sand.u32 %s30, 1
          %s189 = scalar_lea.sflag [#allocation3], %s188
          %s190 = sand.u32 %s30, 1
          %s191 = scalar_lea.vmem [#allocation2], %s190
          %s193 = ssub.s32 16, 16
          %194 = vsyncadd %s189, %s193
          %s195 = smul.addr %s20, 16
          %s196 = scalar_lea.hbm %s0, %s195
          %s198 = sshll.u32 %s191, 4
          %s199 = int_to_ptr.vmem [resolvable:$true] %s198
          %201 = dma.hbm_to_vmem [thread:$0]  %s196, 16, %s199, %s189
        $region28: #{tpu_custom_call.1} parent=23 // pred_fallthru
          _
        // Predicated region
        $region29: #{tpu_custom_call.1} parent=23 // pred_check
          %p202 = pneg %p66
        $region30: #{tpu_custom_call.1} parent=23 // pred_check_branch
          %204 = sbr.rel (%p202) target = $region32
        $region31: #{tpu_custom_call.1} parent=23 // pred_region
          %s205 = sand.u32 %s20, 1
          %s206 = scalar_lea.sflag [#allocation6], %s205
          %s207 = sand.u32 %s56, 1
          %s208 = scalar_lea.vmem [#allocation5], %s207
          %s210 = ssub.s32 16, 16
          %211 = vsyncadd %s206, %s210
          %s212 = smul.addr %s20, 16
          %s213 = scalar_lea.hbm %s1, %s212
          %s215 = sshll.u32 %s208, 4
          %s216 = int_to_ptr.vmem [resolvable:$true] %s215
          %218 = dma.hbm_to_vmem [thread:$0]  %s213, 16, %s216, %s206
        $region32: #{tpu_custom_call.1} parent=23 // pred_fallthru
          _
      $region24: #{tpu_custom_call.1} parent=5 // pred_fallthru
        _
      %p219 = scmp.le.s32.totalorder 1, %s20
      %p220 = scmp.lt.s32.totalorder %s20, 3
      %p221 = pnand %p219, %p220
      %p222 = pneg %p221
      // Predicated region
      $region33: #{tpu_custom_call.1} parent=5 // pred_check
        _
      $region34: #{tpu_custom_call.1} parent=5 // pred_check_branch
        %224 = sbr.rel (%p221) target = $region36
      $region35: #{tpu_custom_call.1} parent=5 // pred_region
        %s225 = ssub.s32 %s20, 1
        %s226 = sand.u32 %s33, 1
        %s227 = scalar_lea.sflag [#allocation3], %s226
        %s228 = sand.u32 %s33, 1
        %s229 = scalar_lea.vmem [#allocation2], %s228
        // Predicated region
        $region37: #{tpu_custom_call.1} parent=35 // pred_check
          %p230 = pneg %p46
        $region38: #{tpu_custom_call.1} parent=35 // pred_check_branch
          %232 = sbr.rel (%p230) target = $region40
        $region39: #{tpu_custom_call.1} parent=35 // pred_region
          %233 = dma.done %s227, 16
        $region40: #{tpu_custom_call.1} parent=35 // pred_fallthru
          _
        %s234 = sand.u32 %s25, 1
        %s235 = scalar_lea.sflag [#allocation6], %s234
        %s236 = sand.u32 %s59, 1
        %s237 = scalar_lea.vmem [#allocation5], %s236
        // Predicated region
        $region41: #{tpu_custom_call.1} parent=35 // pred_check
          %p238 = pneg %p72
        $region42: #{tpu_custom_call.1} parent=35 // pred_check_branch
          %240 = sbr.rel (%p238) target = $region44
        $region43: #{tpu_custom_call.1} parent=35 // pred_region
          %241 = dma.done %s235, 16
        $region44: #{tpu_custom_call.1} parent=35 // pred_fallthru
          _
        // Predicated region
        $region45: #{tpu_custom_call.1} parent=35 // pred_check
          %p242 = pneg %p93
        $region46: #{tpu_custom_call.1} parent=35 // pred_check_branch
          %244 = sbr.rel (%p242) target = $region48
        $region47: #{tpu_custom_call.1} parent=35 // pred_region
          %245 = dma.done [#allocation6], 640
        $region48: #{tpu_custom_call.1} parent=35 // pred_fallthru
          _
        // Predicated region
        $region49: #{tpu_custom_call.1} parent=35 // pred_check
          %p246 = pneg %p114
        $region50: #{tpu_custom_call.1} parent=35 // pred_check_branch
          %248 = sbr.rel (%p246) target = $region52
        $region51: #{tpu_custom_call.1} parent=35 // pred_region
          %249 = dma.done [#allocation9], 640
        $region52: #{tpu_custom_call.1} parent=35 // pred_fallthru
          _
        %s250 = sand.u32 %s33, 1
        %s251 = scalar_lea.sflag [#allocation3], %s250
        %s252 = sand.u32 %s33, 1
        %s253 = scalar_lea.vmem [#allocation2], %s252
        %p254 = pneg %p46
        %p255 = pneg %p43
        %s256 = sand.u32 %s25, 1
        %s257 = scalar_lea.sflag [#allocation6], %s256
        %s258 = sand.u32 %s59, 1
        %s259 = scalar_lea.vmem [#allocation5], %s258
        %p260 = pneg %p72
        %p261 = pneg %p69
        %p262 = pneg %p93
        %p263 = pneg %p90
        %p264 = pneg %p114
        %p265 = pneg %p111
        %p266 = pneg %p140
        %p267 = pneg %p137
        %s268 = sand.u32 %s127, 1
        %s269 = scalar_lea.sflag [#allocation4], %s268
        %s270 = sand.u32 %s127, 1
        %s271 = scalar_lea.vmem [#allocation10], %s270
        %v272 = vld [vmem:[%s229] sm:$0x1]
        %v273 = vld [vmem:[%s237] sm:$0x1]
        %v274 = vlaneseq
        %v275 = vshrl.u32 %v274, 7
        %v276 = vadd.s32 %v275, 8
        %v277 = vadd.s32 %v275, 16
        %v278 = vadd.s32 %v275, 24
        %v279 = vadd.s32 %v275, 32
        %v280 = vadd.s32 %v275, 40
        %v281 = vadd.s32 %v275, 48
        %v282 = vadd.s32 %v275, 56
        %v283 = vadd.s32 %v275, 64
        %v284 = vadd.s32 %v275, 72
        %v285 = vadd.s32 %v275, 80
        %v286 = vadd.s32 %v275, 88
        %v287 = vadd.s32 %v275, 96
        %v288 = vadd.s32 %v275, 104
        %v289 = vadd.s32 %v275, 112
        %v290 = vadd.s32 %v275, 120
        %v291 = vlaneseq
        %v292 = vshrl.u32 %v291, 7
        %v293 = vsub.s32 0, %v292
        %v294 = vrot.slane %v272, %v293
        %vm295 = vcmp.eq.s32.totalorder %v275, %v294
        %vm296 = vcmp.eq.s32.totalorder %v276, %v294
        %vm297 = vcmp.eq.s32.totalorder %v277, %v294
        %vm298 = vcmp.eq.s32.totalorder %v278, %v294
        %vm299 = vcmp.eq.s32.totalorder %v279, %v294
        %vm300 = vcmp.eq.s32.totalorder %v280, %v294
        %vm301 = vcmp.eq.s32.totalorder %v281, %v294
        %vm302 = vcmp.eq.s32.totalorder %v282, %v294
        %vm303 = vcmp.eq.s32.totalorder %v283, %v294
        %vm304 = vcmp.eq.s32.totalorder %v284, %v294
        %vm305 = vcmp.eq.s32.totalorder %v285, %v294
        %vm306 = vcmp.eq.s32.totalorder %v286, %v294
        %vm307 = vcmp.eq.s32.totalorder %v287, %v294
        %vm308 = vcmp.eq.s32.totalorder %v288, %v294
        %vm309 = vcmp.eq.s32.totalorder %v289, %v294
        %vm310 = vcmp.eq.s32.totalorder %v290, %v294
        %v311 = vsel %vm295, 1.0, 0.0
        %v312 = vsel %vm296, 1.0, 0.0
        %v313 = vsel %vm297, 1.0, 0.0
        %v314 = vsel %vm298, 1.0, 0.0
        %v315 = vsel %vm299, 1.0, 0.0
        %v316 = vsel %vm300, 1.0, 0.0
        %v317 = vsel %vm301, 1.0, 0.0
        %v318 = vsel %vm302, 1.0, 0.0
        %v319 = vsel %vm303, 1.0, 0.0
        %v320 = vsel %vm304, 1.0, 0.0
        %v321 = vsel %vm305, 1.0, 0.0
        %v322 = vsel %vm306, 1.0, 0.0
        %v323 = vsel %vm307, 1.0, 0.0
        %v324 = vsel %vm308, 1.0, 0.0
        %v325 = vsel %vm309, 1.0, 0.0
        %v326 = vsel %vm310, 1.0, 0.0
        %v327 = vlaneseq
        %v328 = vshrl.u32 %v327, 7
        %v329 = vsub.s32 0, %v328
        %v330 = vrot.slane %v273, %v329
        %vm331 = vcmp.eq.s32.totalorder %v275, %v330
        %vm332 = vcmp.eq.s32.totalorder %v276, %v330
        %vm333 = vcmp.eq.s32.totalorder %v277, %v330
        %vm334 = vcmp.eq.s32.totalorder %v278, %v330
        %vm335 = vcmp.eq.s32.totalorder %v279, %v330
        %vm336 = vcmp.eq.s32.totalorder %v280, %v330
        %vm337 = vcmp.eq.s32.totalorder %v281, %v330
        %vm338 = vcmp.eq.s32.totalorder %v282, %v330
        %vm339 = vcmp.eq.s32.totalorder %v283, %v330
        %vm340 = vcmp.eq.s32.totalorder %v284, %v330
        %vm341 = vcmp.eq.s32.totalorder %v285, %v330
        %vm342 = vcmp.eq.s32.totalorder %v286, %v330
        %vm343 = vcmp.eq.s32.totalorder %v287, %v330
        %vm344 = vcmp.eq.s32.totalorder %v288, %v330
        %vm345 = vcmp.eq.s32.totalorder %v289, %v330
        %vm346 = vcmp.eq.s32.totalorder %v290, %v330
        %v347 = vsel %vm331, 1.0, 0.0
        %v348 = vsel %vm332, 1.0, 0.0
        %v349 = vsel %vm333, 1.0, 0.0
        %v350 = vsel %vm334, 1.0, 0.0
        %v351 = vsel %vm335, 1.0, 0.0
        %v352 = vsel %vm336, 1.0, 0.0
        %v353 = vsel %vm337, 1.0, 0.0
        %v354 = vsel %vm338, 1.0, 0.0
        %v355 = vsel %vm339, 1.0, 0.0
        %v356 = vsel %vm340, 1.0, 0.0
        %v357 = vsel %vm341, 1.0, 0.0
        %v358 = vsel %vm342, 1.0, 0.0
        %v359 = vsel %vm343, 1.0, 0.0
        %v360 = vsel %vm344, 1.0, 0.0
        %v361 = vsel %vm345, 1.0, 0.0
        %v362 = vsel %vm346, 1.0, 0.0
        %v363 = vld [vmem:[#allocation7] sm:$0xff]
        %v364 = vld [vmem:[#allocation7 + $0x8] sm:$0xff]
        %v365 = vld [vmem:[#allocation7 + $0x10] sm:$0xff]
        %v366 = vld [vmem:[#allocation7 + $0x18] sm:$0xff]
        %v367 = vld [vmem:[#allocation7 + $0x20] sm:$0xff]
        %368 = vmatprep.subr.mxu0 0.0
        %369 = vmatpush1.msra.mxu0 %v326
        %370 = vmatprep.subr.mxu0 0.0
        %371 = vmatpush1.msra.mxu0 %v325
        %372 = vmatprep.subr.mxu0 0.0
        %373 = vmatpush1.msra.mxu0 %v324
        %374 = vmatprep.subr.mxu0 0.0
        %375 = vmatpush1.msra.mxu0 %v323
        %376 = vmatprep.subr.mxu0 0.0
        %377 = vmatpush1.msra.mxu0 %v322
        %378 = vmatprep.subr.mxu0 0.0
        %379 = vmatpush1.msra.mxu0 %v321
        %380 = vmatprep.subr.mxu0 0.0
        %381 = vmatpush1.msra.mxu0 %v320
        %382 = vmatprep.subr.mxu0 0.0
        %383 = vmatpush1.msra.mxu0 %v319
        %384 = vmatprep.subr.mxu0 0.0
        %385 = vmatpush1.msra.mxu0 %v318
        %386 = vmatprep.subr.mxu0 0.0
        %387 = vmatpush1.msra.mxu0 %v317
        %388 = vmatprep.subr.mxu0 0.0
        %389 = vmatpush1.msra.mxu0 %v316
        %390 = vmatprep.subr.mxu0 0.0
        %391 = vmatpush1.msra.mxu0 %v315
        %392 = vmatprep.subr.mxu0 0.0
        %393 = vmatpush1.msra.mxu0 %v314
        %394 = vmatprep.subr.mxu0 0.0
        %395 = vmatpush1.msra.mxu0 %v313
        %396 = vmatprep.subr.mxu0 0.0
        %397 = vmatpush1.msra.mxu0 %v312
        %398 = vmatprep.subr.mxu0 0.0
        %399 = vmatpush1.msra.mxu0 %v311
        %400 = vmatprep.subr.mxu0 0.0
        %401 = vmatpush2.msra.mxu0 0.0
        %402 = vmatprep.subr.mxu0 0.0
        %403 = vmatpush2.msra.mxu0 0.0
        %404 = vmatprep.subr.mxu0 0.0
        %405 = vmatpush2.msra.mxu0 0.0
        %406 = vmatprep.subr.mxu0 0.0
        %407 = vmatpush2.msra.mxu0 0.0
        %408 = vmatprep.subr.mxu0 0.0
        %409 = vmatpush2.msra.mxu0 0.0
        %410 = vmatprep.subr.mxu0 0.0
        %411 = vmatpush2.msra.mxu0 0.0
        %412 = vmatprep.subr.mxu0 0.0
        %413 = vmatpush2.msra.mxu0 0.0
        %414 = vmatprep.subr.mxu0 0.0
        %415 = vmatpush2.msra.mxu0 0.0
        %416 = vmatprep.subr.mxu0 0.0
        %417 = vmatpush2.msra.mxu0 0.0
        %418 = vmatprep.subr.mxu0 0.0
        %419 = vmatpush2.msra.mxu0 0.0
        %420 = vmatprep.subr.mxu0 0.0
        %421 = vmatpush2.msra.mxu0 0.0
        %422 = vmatprep.subr.mxu0 0.0
        %423 = vmatpush2.msra.mxu0 0.0
        %424 = vmatprep.subr.mxu0 0.0
        %425 = vmatpush2.msra.mxu0 0.0
        %426 = vmatprep.subr.mxu0 0.0
        %427 = vmatpush2.msra.mxu0 0.0
        %428 = vmatprep.subr.mxu0 0.0
        %429 = vmatpush2.msra.mxu0 0.0
        %430 = vmatprep.subr.mxu0 0.0
        %431 = vmatpush2.msra.mxu0 0.0
        %432 = vmatprep.mubr.f32.mxu0 0.0
        %v433 = vand.u32 %v363, 4294901760
        %v434 = vsub.f32 %v363, %v433
        %v435 = vand.u32 %v434, 4294901760
        %v436 = vsub.f32 %v434, %v435
        %v437 = vand.u32 %v436, 4294901760
        %438 = vmatmul.mubr.f32.gmra.mxu0 %v437
        %v439 = vpop.f32.mrf.mxu0
        %v440 = vadd.f32 0.0, %v439
        %v441 = vpop.f32.mrf.mxu0
        %442 = vmatprep.mubr.f32.mxu0 0.0
        %v443 = vand.u32 %v364, 4294901760
        %v444 = vsub.f32 %v364, %v443
        %v445 = vand.u32 %v444, 4294901760
        %v446 = vsub.f32 %v444, %v445
        %v447 = vand.u32 %v446, 4294901760
        %448 = vmatmul.mubr.f32.gmra.mxu0 %v447
        %v449 = vpop.f32.mrf.mxu0
        %v450 = vadd.f32 0.0, %v449
        %v451 = vpop.f32.mrf.mxu0
        %452 = vmatprep.mubr.f32.mxu0 0.0
        %v453 = vand.u32 %v365, 4294901760
        %v454 = vsub.f32 %v365, %v453
        %v455 = vand.u32 %v454, 4294901760
        %v456 = vsub.f32 %v454, %v455
        %v457 = vand.u32 %v456, 4294901760
        %458 = vmatmul.mubr.f32.gmra.mxu0 %v457
        %v459 = vpop.f32.mrf.mxu0
        %v460 = vadd.f32 0.0, %v459
        %v461 = vpop.f32.mrf.mxu0
        %462 = vmatprep.mubr.f32.mxu0 0.0
        %v463 = vand.u32 %v366, 4294901760
        %v464 = vsub.f32 %v366, %v463
        %v465 = vand.u32 %v464, 4294901760
        %v466 = vsub.f32 %v464, %v465
        %v467 = vand.u32 %v466, 4294901760
        %468 = vmatmul.mubr.f32.gmra.mxu0 %v467
        %v469 = vpop.f32.mrf.mxu0
        %v470 = vadd.f32 0.0, %v469
        %v471 = vpop.f32.mrf.mxu0
        %472 = vmatprep.mubr.f32.mxu0 0.0
        %v473 = vand.u32 %v367, 4294901760
        %v474 = vsub.f32 %v367, %v473
        %v475 = vand.u32 %v474, 4294901760
        %v476 = vsub.f32 %v474, %v475
        %v477 = vand.u32 %v476, 4294901760
        %478 = vmatmul.mubr.f32.gmra.mxu0 %v477
        %v479 = vpop.f32.mrf.mxu0
        %v480 = vadd.f32 0.0, %v479
        %v481 = vpop.f32.mrf.mxu0
        %482 = vdwg.mxu0
        %483 = vmatprep.subr.mxu0 0.0
        %v484 = vsub.f32 %v326, %v326
        %v485 = vand.u32 %v484, 4294901760
        %v486 = vsub.f32 %v484, %v485
        %v487 = vand.u32 %v486, 4294901760
        %488 = vmatpush1.msra.mxu0 %v487
        %489 = vmatprep.subr.mxu0 0.0
        %v490 = vsub.f32 %v325, %v325
        %v491 = vand.u32 %v490, 4294901760
        %v492 = vsub.f32 %v490, %v491
        %v493 = vand.u32 %v492, 4294901760
        %494 = vmatpush1.msra.mxu0 %v493
        %495 = vmatprep.subr.mxu0 0.0
        %v496 = vsub.f32 %v324, %v324
        %v497 = vand.u32 %v496, 4294901760
        %v498 = vsub.f32 %v496, %v497
        %v499 = vand.u32 %v498, 4294901760
        %500 = vmatpush1.msra.mxu0 %v499
        %501 = vmatprep.subr.mxu0 0.0
        %v502 = vsub.f32 %v323, %v323
        %v503 = vand.u32 %v502, 4294901760
        %v504 = vsub.f32 %v502, %v503
        %v505 = vand.u32 %v504, 4294901760
        %506 = vmatpush1.msra.mxu0 %v505
        %507 = vmatprep.subr.mxu0 0.0
        %v508 = vsub.f32 %v322, %v322
        %v509 = vand.u32 %v508, 4294901760
        %v510 = vsub.f32 %v508, %v509
        %v511 = vand.u32 %v510, 4294901760
        %512 = vmatpush1.msra.mxu0 %v511
        %513 = vmatprep.subr.mxu0 0.0
        %v514 = vsub.f32 %v321, %v321
        %v515 = vand.u32 %v514, 4294901760
        %v516 = vsub.f32 %v514, %v515
        %v517 = vand.u32 %v516, 4294901760
        %518 = vmatpush1.msra.mxu0 %v517
        %519 = vmatprep.subr.mxu0 0.0
        %v520 = vsub.f32 %v320, %v320
        %v521 = vand.u32 %v520, 4294901760
        %v522 = vsub.f32 %v520, %v521
        %v523 = vand.u32 %v522, 4294901760
        %524 = vmatpush1.msra.mxu0 %v523
        %525 = vmatprep.subr.mxu0 0.0
        %v526 = vsub.f32 %v319, %v319
        %v527 = vand.u32 %v526, 4294901760
        %v528 = vsub.f32 %v526, %v527
        %v529 = vand.u32 %v528, 4294901760
        %530 = vmatpush1.msra.mxu0 %v529
        %531 = vmatprep.subr.mxu0 0.0
        %v532 = vsub.f32 %v318, %v318
        %v533 = vand.u32 %v532, 4294901760
        %v534 = vsub.f32 %v532, %v533
        %v535 = vand.u32 %v534, 4294901760
        %536 = vmatpush1.msra.mxu0 %v535
        %537 = vmatprep.subr.mxu0 0.0
        %v538 = vsub.f32 %v317, %v317
        %v539 = vand.u32 %v538, 4294901760
        %v540 = vsub.f32 %v538, %v539
        %v541 = vand.u32 %v540, 4294901760
        %542 = vmatpush1.msra.mxu0 %v541
        %543 = vmatprep.subr.mxu0 0.0
        %v544 = vsub.f32 %v316, %v316
        %v545 = vand.u32 %v544, 4294901760
        %v546 = vsub.f32 %v544, %v545
        %v547 = vand.u32 %v546, 4294901760
        %548 = vmatpush1.msra.mxu0 %v547
        %549 = vmatprep.subr.mxu0 0.0
        %v550 = vsub.f32 %v315, %v315
        %v551 = vand.u32 %v550, 4294901760
        %v552 = vsub.f32 %v550, %v551
        %v553 = vand.u32 %v552, 4294901760
        %554 = vmatpush1.msra.mxu0 %v553
        %555 = vmatprep.subr.mxu0 0.0
        %v556 = vsub.f32 %v314, %v314
        %v557 = vand.u32 %v556, 4294901760
        %v558 = vsub.f32 %v556, %v557
        %v559 = vand.u32 %v558, 4294901760
        %560 = vmatpush1.msra.mxu0 %v559
        %561 = vmatprep.subr.mxu0 0.0
        %v562 = vsub.f32 %v313, %v313
        %v563 = vand.u32 %v562, 4294901760
        %v564 = vsub.f32 %v562, %v563
        %v565 = vand.u32 %v564, 4294901760
        %566 = vmatpush1.msra.mxu0 %v565
        %567 = vmatprep.subr.mxu0 0.0
        %v568 = vsub.f32 %v312, %v312
        %v569 = vand.u32 %v568, 4294901760
        %v570 = vsub.f32 %v568, %v569
        %v571 = vand.u32 %v570, 4294901760
        %572 = vmatpush1.msra.mxu0 %v571
        %573 = vmatprep.subr.mxu0 0.0
        %v574 = vsub.f32 %v311, %v311
        %v575 = vand.u32 %v574, 4294901760
        %v576 = vsub.f32 %v574, %v575
        %v577 = vand.u32 %v576, 4294901760
        %578 = vmatpush1.msra.mxu0 %v577
        %579 = vmatprep.subr.mxu0 0.0
        %580 = vmatpush2.msra.mxu0 0.0
        %581 = vmatprep.subr.mxu0 0.0
        %582 = vmatpush2.msra.mxu0 0.0
        %583 = vmatprep.subr.mxu0 0.0
        %584 = vmatpush2.msra.mxu0 0.0
        %585 = vmatprep.subr.mxu0 0.0
        %586 = vmatpush2.msra.mxu0 0.0
        %587 = vmatprep.subr.mxu0 0.0
        %588 = vmatpush2.msra.mxu0 0.0
        %589 = vmatprep.subr.mxu0 0.0
        %590 = vmatpush2.msra.mxu0 0.0
        %591 = vmatprep.subr.mxu0 0.0
        %592 = vmatpush2.msra.mxu0 0.0
        %593 = vmatprep.subr.mxu0 0.0
        %594 = vmatpush2.msra.mxu0 0.0
        %595 = vmatprep.subr.mxu0 0.0
        %596 = vmatpush2.msra.mxu0 0.0
        %597 = vmatprep.subr.mxu0 0.0
        %598 = vmatpush2.msra.mxu0 0.0
        %599 = vmatprep.subr.mxu0 0.0
        %600 = vmatpush2.msra.mxu0 0.0
        %601 = vmatprep.subr.mxu0 0.0
        %602 = vmatpush2.msra.mxu0 0.0
        %603 = vmatprep.subr.mxu0 0.0
        %604 = vmatpush2.msra.mxu0 0.0
        %605 = vmatprep.subr.mxu0 0.0
        %606 = vmatpush2.msra.mxu0 0.0
        %607 = vmatprep.subr.mxu0 0.0
        %608 = vmatpush2.msra.mxu0 0.0
        %609 = vmatprep.subr.mxu0 0.0
        %610 = vmatpush2.msra.mxu0 0.0
        %611 = vmatprep.mubr.f32.mxu0 0.0
        %v612 = vand.u32 %v363, 4294901760
        %613 = vmatmul.mubr.f32.gmra.mxu0 %v612
        %v614 = vpop.f32.mrf.mxu0
        %v615 = vadd.f32 %v440, %v614
        %v616 = vpop.f32.mrf.mxu0
        %617 = vmatprep.mubr.f32.mxu0 0.0
        %v618 = vand.u32 %v364, 4294901760
        %619 = vmatmul.mubr.f32.gmra.mxu0 %v618
        %v620 = vpop.f32.mrf.mxu0
        %v621 = vadd.f32 %v450, %v620
        %v622 = vpop.f32.mrf.mxu0
        %623 = vmatprep.mubr.f32.mxu0 0.0
        %v624 = vand.u32 %v365, 4294901760
        %625 = vmatmul.mubr.f32.gmra.mxu0 %v624
        %v626 = vpop.f32.mrf.mxu0
        %v627 = vadd.f32 %v460, %v626
        %v628 = vpop.f32.mrf.mxu0
        %629 = vmatprep.mubr.f32.mxu0 0.0
        %v630 = vand.u32 %v366, 4294901760
        %631 = vmatmul.mubr.f32.gmra.mxu0 %v630
        %v632 = vpop.f32.mrf.mxu0
        %v633 = vadd.f32 %v470, %v632
        %v634 = vpop.f32.mrf.mxu0
        %635 = vmatprep.mubr.f32.mxu0 0.0
        %v636 = vand.u32 %v367, 4294901760
        %637 = vmatmul.mubr.f32.gmra.mxu0 %v636
        %v638 = vpop.f32.mrf.mxu0
        %v639 = vadd.f32 %v480, %v638
        %v640 = vpop.f32.mrf.mxu0
        %641 = vdwg.mxu0
        %642 = vmatprep.subr.mxu0 0.0
        %v643 = vsub.f32 %v326, %v326
        %644 = vmatpush1.msra.mxu0 %v643
        %645 = vmatprep.subr.mxu0 0.0
        %v646 = vsub.f32 %v325, %v325
        %647 = vmatpush1.msra.mxu0 %v646
        %648 = vmatprep.subr.mxu0 0.0
        %v649 = vsub.f32 %v324, %v324
        %650 = vmatpush1.msra.mxu0 %v649
        %651 = vmatprep.subr.mxu0 0.0
        %v652 = vsub.f32 %v323, %v323
        %653 = vmatpush1.msra.mxu0 %v652
        %654 = vmatprep.subr.mxu0 0.0
        %v655 = vsub.f32 %v322, %v322
        %656 = vmatpush1.msra.mxu0 %v655
        %657 = vmatprep.subr.mxu0 0.0
        %v658 = vsub.f32 %v321, %v321
        %659 = vmatpush1.msra.mxu0 %v658
        %660 = vmatprep.subr.mxu0 0.0
        %v661 = vsub.f32 %v320, %v320
        %662 = vmatpush1.msra.mxu0 %v661
        %663 = vmatprep.subr.mxu0 0.0
        %v664 = vsub.f32 %v319, %v319
        %665 = vmatpush1.msra.mxu0 %v664
        %666 = vmatprep.subr.mxu0 0.0
        %v667 = vsub.f32 %v318, %v318
        %668 = vmatpush1.msra.mxu0 %v667
        %669 = vmatprep.subr.mxu0 0.0
        %v670 = vsub.f32 %v317, %v317
        %671 = vmatpush1.msra.mxu0 %v670
        %672 = vmatprep.subr.mxu0 0.0
        %v673 = vsub.f32 %v316, %v316
        %674 = vmatpush1.msra.mxu0 %v673
        %675 = vmatprep.subr.mxu0 0.0
        %v676 = vsub.f32 %v315, %v315
        %677 = vmatpush1.msra.mxu0 %v676
        %678 = vmatprep.subr.mxu0 0.0
        %v679 = vsub.f32 %v314, %v314
        %680 = vmatpush1.msra.mxu0 %v679
        %681 = vmatprep.subr.mxu0 0.0
        %v682 = vsub.f32 %v313, %v313
        %683 = vmatpush1.msra.mxu0 %v682
        %684 = vmatprep.subr.mxu0 0.0
        %v685 = vsub.f32 %v312, %v312
        %686 = vmatpush1.msra.mxu0 %v685
        %687 = vmatprep.subr.mxu0 0.0
        %v688 = vsub.f32 %v311, %v311
        %689 = vmatpush1.msra.mxu0 %v688
        %690 = vmatprep.subr.mxu0 0.0
        %691 = vmatpush2.msra.mxu0 0.0
        %692 = vmatprep.subr.mxu0 0.0
        %693 = vmatpush2.msra.mxu0 0.0
        %694 = vmatprep.subr.mxu0 0.0
        %695 = vmatpush2.msra.mxu0 0.0
        %696 = vmatprep.subr.mxu0 0.0
        %697 = vmatpush2.msra.mxu0 0.0
        %698 = vmatprep.subr.mxu0 0.0
        %699 = vmatpush2.msra.mxu0 0.0
        %700 = vmatprep.subr.mxu0 0.0
        %701 = vmatpush2.msra.mxu0 0.0
        %702 = vmatprep.subr.mxu0 0.0
        %703 = vmatpush2.msra.mxu0 0.0
        %704 = vmatprep.subr.mxu0 0.0
        %705 = vmatpush2.msra.mxu0 0.0
        %706 = vmatprep.subr.mxu0 0.0
        %707 = vmatpush2.msra.mxu0 0.0
        %708 = vmatprep.subr.mxu0 0.0
        %709 = vmatpush2.msra.mxu0 0.0
        %710 = vmatprep.subr.mxu0 0.0
        %711 = vmatpush2.msra.mxu0 0.0
        %712 = vmatprep.subr.mxu0 0.0
        %713 = vmatpush2.msra.mxu0 0.0
        %714 = vmatprep.subr.mxu0 0.0
        %715 = vmatpush2.msra.mxu0 0.0
        %716 = vmatprep.subr.mxu0 0.0
        %717 = vmatpush2.msra.mxu0 0.0
        %718 = vmatprep.subr.mxu0 0.0
        %719 = vmatpush2.msra.mxu0 0.0
        %720 = vmatprep.subr.mxu0 0.0
        %721 = vmatpush2.msra.mxu0 0.0
        %722 = vmatprep.mubr.f32.mxu0 0.0
        %v723 = vand.u32 %v363, 4294901760
        %v724 = vsub.f32 %v363, %v723
        %725 = vmatmul.mubr.f32.gmra.mxu0 %v724
        %v726 = vpop.f32.mrf.mxu0
        %v727 = vadd.f32 %v615, %v726
        %v728 = vpop.f32.mrf.mxu0
        %729 = vmatprep.mubr.f32.mxu0 0.0
        %v730 = vand.u32 %v364, 4294901760
        %v731 = vsub.f32 %v364, %v730
        %732 = vmatmul.mubr.f32.gmra.mxu0 %v731
        %v733 = vpop.f32.mrf.mxu0
        %v734 = vadd.f32 %v621, %v733
        %v735 = vpop.f32.mrf.mxu0
        %736 = vmatprep.mubr.f32.mxu0 0.0
        %v737 = vand.u32 %v365, 4294901760
        %v738 = vsub.f32 %v365, %v737
        %739 = vmatmul.mubr.f32.gmra.mxu0 %v738
        %v740 = vpop.f32.mrf.mxu0
        %v741 = vadd.f32 %v627, %v740
        %v742 = vpop.f32.mrf.mxu0
        %743 = vmatprep.mubr.f32.mxu0 0.0
        %v744 = vand.u32 %v366, 4294901760
        %v745 = vsub.f32 %v366, %v744
        %746 = vmatmul.mubr.f32.gmra.mxu0 %v745
        %v747 = vpop.f32.mrf.mxu0
        %v748 = vadd.f32 %v633, %v747
        %v749 = vpop.f32.mrf.mxu0
        %750 = vmatprep.mubr.f32.mxu0 0.0
        %v751 = vand.u32 %v367, 4294901760
        %v752 = vsub.f32 %v367, %v751
        %753 = vmatmul.mubr.f32.gmra.mxu0 %v752
        %v754 = vpop.f32.mrf.mxu0
        %v755 = vadd.f32 %v639, %v754
        %v756 = vpop.f32.mrf.mxu0
        %757 = vdwg.mxu0
        %758 = vmatprep.subr.mxu0 0.0
        %759 = vmatpush1.msra.mxu0 %v326
        %760 = vmatprep.subr.mxu0 0.0
        %761 = vmatpush1.msra.mxu0 %v325
        %762 = vmatprep.subr.mxu0 0.0
        %763 = vmatpush1.msra.mxu0 %v324
        %764 = vmatprep.subr.mxu0 0.0
        %765 = vmatpush1.msra.mxu0 %v323
        %766 = vmatprep.subr.mxu0 0.0
        %767 = vmatpush1.msra.mxu0 %v322
        %768 = vmatprep.subr.mxu0 0.0
        %769 = vmatpush1.msra.mxu0 %v321
        %770 = vmatprep.subr.mxu0 0.0
        %771 = vmatpush1.msra.mxu0 %v320
        %772 = vmatprep.subr.mxu0 0.0
        %773 = vmatpush1.msra.mxu0 %v319
        %774 = vmatprep.subr.mxu0 0.0
        %775 = vmatpush1.msra.mxu0 %v318
        %776 = vmatprep.subr.mxu0 0.0
        %777 = vmatpush1.msra.mxu0 %v317
        %778 = vmatprep.subr.mxu0 0.0
        %779 = vmatpush1.msra.mxu0 %v316
        %780 = vmatprep.subr.mxu0 0.0
        %781 = vmatpush1.msra.mxu0 %v315
        %782 = vmatprep.subr.mxu0 0.0
        %783 = vmatpush1.msra.mxu0 %v314
        %784 = vmatprep.subr.mxu0 0.0
        %785 = vmatpush1.msra.mxu0 %v313
        %786 = vmatprep.subr.mxu0 0.0
        %787 = vmatpush1.msra.mxu0 %v312
        %788 = vmatprep.subr.mxu0 0.0
        %789 = vmatpush1.msra.mxu0 %v311
        %790 = vmatprep.subr.mxu0 0.0
        %791 = vmatpush2.msra.mxu0 0.0
        %792 = vmatprep.subr.mxu0 0.0
        %793 = vmatpush2.msra.mxu0 0.0
        %794 = vmatprep.subr.mxu0 0.0
        %795 = vmatpush2.msra.mxu0 0.0
        %796 = vmatprep.subr.mxu0 0.0
        %797 = vmatpush2.msra.mxu0 0.0
        %798 = vmatprep.subr.mxu0 0.0
        %799 = vmatpush2.msra.mxu0 0.0
        %800 = vmatprep.subr.mxu0 0.0
        %801 = vmatpush2.msra.mxu0 0.0
        %802 = vmatprep.subr.mxu0 0.0
        %803 = vmatpush2.msra.mxu0 0.0
        %804 = vmatprep.subr.mxu0 0.0
        %805 = vmatpush2.msra.mxu0 0.0
        %806 = vmatprep.subr.mxu0 0.0
        %807 = vmatpush2.msra.mxu0 0.0
        %808 = vmatprep.subr.mxu0 0.0
        %809 = vmatpush2.msra.mxu0 0.0
        %810 = vmatprep.subr.mxu0 0.0
        %811 = vmatpush2.msra.mxu0 0.0
        %812 = vmatprep.subr.mxu0 0.0
        %813 = vmatpush2.msra.mxu0 0.0
        %814 = vmatprep.subr.mxu0 0.0
        %815 = vmatpush2.msra.mxu0 0.0
        %816 = vmatprep.subr.mxu0 0.0
        %817 = vmatpush2.msra.mxu0 0.0
        %818 = vmatprep.subr.mxu0 0.0
        %819 = vmatpush2.msra.mxu0 0.0
        %820 = vmatprep.subr.mxu0 0.0
        %821 = vmatpush2.msra.mxu0 0.0
        %822 = vmatprep.mubr.f32.mxu0 0.0
        %v823 = vand.u32 %v363, 4294901760
        %v824 = vsub.f32 %v363, %v823
        %v825 = vand.u32 %v824, 4294901760
        %826 = vmatmul.mubr.f32.gmra.mxu0 %v825
        %v827 = vpop.f32.mrf.mxu0
        %v828 = vadd.f32 %v727, %v827
        %v829 = vpop.f32.mrf.mxu0
        %830 = vmatprep.mubr.f32.mxu0 0.0
        %v831 = vand.u32 %v364, 4294901760
        %v832 = vsub.f32 %v364, %v831
        %v833 = vand.u32 %v832, 4294901760
        %834 = vmatmul.mubr.f32.gmra.mxu0 %v833
        %v835 = vpop.f32.mrf.mxu0
        %v836 = vadd.f32 %v734, %v835
        %v837 = vpop.f32.mrf.mxu0
        %838 = vmatprep.mubr.f32.mxu0 0.0
        %v839 = vand.u32 %v365, 4294901760
        %v840 = vsub.f32 %v365, %v839
        %v841 = vand.u32 %v840, 4294901760
        %842 = vmatmul.mubr.f32.gmra.mxu0 %v841
        %v843 = vpop.f32.mrf.mxu0
        %v844 = vadd.f32 %v741, %v843
        %v845 = vpop.f32.mrf.mxu0
        %846 = vmatprep.mubr.f32.mxu0 0.0
        %v847 = vand.u32 %v366, 4294901760
        %v848 = vsub.f32 %v366, %v847
        %v849 = vand.u32 %v848, 4294901760
        %850 = vmatmul.mubr.f32.gmra.mxu0 %v849
        %v851 = vpop.f32.mrf.mxu0
        %v852 = vadd.f32 %v748, %v851
        %v853 = vpop.f32.mrf.mxu0
        %854 = vmatprep.mubr.f32.mxu0 0.0
        %v855 = vand.u32 %v367, 4294901760
        %v856 = vsub.f32 %v367, %v855
        %v857 = vand.u32 %v856, 4294901760
        %858 = vmatmul.mubr.f32.gmra.mxu0 %v857
        %v859 = vpop.f32.mrf.mxu0
        %v860 = vadd.f32 %v755, %v859
        %v861 = vpop.f32.mrf.mxu0
        %862 = vdwg.mxu0
        %863 = vmatprep.subr.mxu0 0.0
        %v864 = vsub.f32 %v326, %v326
        %v865 = vand.u32 %v864, 4294901760
        %866 = vmatpush1.msra.mxu0 %v865
        %867 = vmatprep.subr.mxu0 0.0
        %v868 = vsub.f32 %v325, %v325
        %v869 = vand.u32 %v868, 4294901760
        %870 = vmatpush1.msra.mxu0 %v869
        %871 = vmatprep.subr.mxu0 0.0
        %v872 = vsub.f32 %v324, %v324
        %v873 = vand.u32 %v872, 4294901760
        %874 = vmatpush1.msra.mxu0 %v873
        %875 = vmatprep.subr.mxu0 0.0
        %v876 = vsub.f32 %v323, %v323
        %v877 = vand.u32 %v876, 4294901760
        %878 = vmatpush1.msra.mxu0 %v877
        %879 = vmatprep.subr.mxu0 0.0
        %v880 = vsub.f32 %v322, %v322
        %v881 = vand.u32 %v880, 4294901760
        %882 = vmatpush1.msra.mxu0 %v881
        %883 = vmatprep.subr.mxu0 0.0
        %v884 = vsub.f32 %v321, %v321
        %v885 = vand.u32 %v884, 4294901760
        %886 = vmatpush1.msra.mxu0 %v885
        %887 = vmatprep.subr.mxu0 0.0
        %v888 = vsub.f32 %v320, %v320
        %v889 = vand.u32 %v888, 4294901760
        %890 = vmatpush1.msra.mxu0 %v889
        %891 = vmatprep.subr.mxu0 0.0
        %v892 = vsub.f32 %v319, %v319
        %v893 = vand.u32 %v892, 4294901760
        %894 = vmatpush1.msra.mxu0 %v893
        %895 = vmatprep.subr.mxu0 0.0
        %v896 = vsub.f32 %v318, %v318
        %v897 = vand.u32 %v896, 4294901760
        %898 = vmatpush1.msra.mxu0 %v897
        %899 = vmatprep.subr.mxu0 0.0
        %v900 = vsub.f32 %v317, %v317
        %v901 = vand.u32 %v900, 4294901760
        %902 = vmatpush1.msra.mxu0 %v901
        %903 = vmatprep.subr.mxu0 0.0
        %v904 = vsub.f32 %v316, %v316
        %v905 = vand.u32 %v904, 4294901760
        %906 = vmatpush1.msra.mxu0 %v905
        %907 = vmatprep.subr.mxu0 0.0
        %v908 = vsub.f32 %v315, %v315
        %v909 = vand.u32 %v908, 4294901760
        %910 = vmatpush1.msra.mxu0 %v909
        %911 = vmatprep.subr.mxu0 0.0
        %v912 = vsub.f32 %v314, %v314
        %v913 = vand.u32 %v912, 4294901760
        %914 = vmatpush1.msra.mxu0 %v913
        %915 = vmatprep.subr.mxu0 0.0
        %v916 = vsub.f32 %v313, %v313
        %v917 = vand.u32 %v916, 4294901760
        %918 = vmatpush1.msra.mxu0 %v917
        %919 = vmatprep.subr.mxu0 0.0
        %v920 = vsub.f32 %v312, %v312
        %v921 = vand.u32 %v920, 4294901760
        %922 = vmatpush1.msra.mxu0 %v921
        %923 = vmatprep.subr.mxu0 0.0
        %v924 = vsub.f32 %v311, %v311
        %v925 = vand.u32 %v924, 4294901760
        %926 = vmatpush1.msra.mxu0 %v925
        %927 = vmatprep.subr.mxu0 0.0
        %928 = vmatpush2.msra.mxu0 0.0
        %929 = vmatprep.subr.mxu0 0.0
        %930 = vmatpush2.msra.mxu0 0.0
        %931 = vmatprep.subr.mxu0 0.0
        %932 = vmatpush2.msra.mxu0 0.0
        %933 = vmatprep.subr.mxu0 0.0
        %934 = vmatpush2.msra.mxu0 0.0
        %935 = vmatprep.subr.mxu0 0.0
        %936 = vmatpush2.msra.mxu0 0.0
        %937 = vmatprep.subr.mxu0 0.0
        %938 = vmatpush2.msra.mxu0 0.0
        %939 = vmatprep.subr.mxu0 0.0
        %940 = vmatpush2.msra.mxu0 0.0
        %941 = vmatprep.subr.mxu0 0.0
        %942 = vmatpush2.msra.mxu0 0.0
        %943 = vmatprep.subr.mxu0 0.0
        %944 = vmatpush2.msra.mxu0 0.0
        %945 = vmatprep.subr.mxu0 0.0
        %946 = vmatpush2.msra.mxu0 0.0
        %947 = vmatprep.subr.mxu0 0.0
        %948 = vmatpush2.msra.mxu0 0.0
        %949 = vmatprep.subr.mxu0 0.0
        %950 = vmatpush2.msra.mxu0 0.0
        %951 = vmatprep.subr.mxu0 0.0
        %952 = vmatpush2.msra.mxu0 0.0
        %953 = vmatprep.subr.mxu0 0.0
        %954 = vmatpush2.msra.mxu0 0.0
        %955 = vmatprep.subr.mxu0 0.0
        %956 = vmatpush2.msra.mxu0 0.0
        %957 = vmatprep.subr.mxu0 0.0
        %958 = vmatpush2.msra.mxu0 0.0
        %959 = vmatprep.mubr.f32.mxu0 0.0
        %v960 = vand.u32 %v363, 4294901760
        %961 = vmatmul.mubr.f32.gmra.mxu0 %v960
        %v962 = vpop.f32.mrf.mxu0
        %v963 = vadd.f32 %v828, %v962
        %v964 = vpop.f32.mrf.mxu0
        %965 = vmatprep.mubr.f32.mxu0 0.0
        %v966 = vand.u32 %v364, 4294901760
        %967 = vmatmul.mubr.f32.gmra.mxu0 %v966
        %v968 = vpop.f32.mrf.mxu0
        %v969 = vadd.f32 %v836, %v968
        %v970 = vpop.f32.mrf.mxu0
        %971 = vmatprep.mubr.f32.mxu0 0.0
        %v972 = vand.u32 %v365, 4294901760
        %973 = vmatmul.mubr.f32.gmra.mxu0 %v972
        %v974 = vpop.f32.mrf.mxu0
        %v975 = vadd.f32 %v844, %v974
        %v976 = vpop.f32.mrf.mxu0
        %977 = vmatprep.mubr.f32.mxu0 0.0
        %v978 = vand.u32 %v366, 4294901760
        %979 = vmatmul.mubr.f32.gmra.mxu0 %v978
        %v980 = vpop.f32.mrf.mxu0
        %v981 = vadd.f32 %v852, %v980
        %v982 = vpop.f32.mrf.mxu0
        %983 = vmatprep.mubr.f32.mxu0 0.0
        %v984 = vand.u32 %v367, 4294901760
        %985 = vmatmul.mubr.f32.gmra.mxu0 %v984
        %v986 = vpop.f32.mrf.mxu0
        %v987 = vadd.f32 %v860, %v986
        %v988 = vpop.f32.mrf.mxu0
        %989 = vdwg.mxu0
        %990 = vmatprep.subr.mxu0 0.0
        %991 = vmatpush1.msra.mxu0 %v326
        %992 = vmatprep.subr.mxu0 0.0
        %993 = vmatpush1.msra.mxu0 %v325
        %994 = vmatprep.subr.mxu0 0.0
        %995 = vmatpush1.msra.mxu0 %v324
        %996 = vmatprep.subr.mxu0 0.0
        %997 = vmatpush1.msra.mxu0 %v323
        %998 = vmatprep.subr.mxu0 0.0
        %999 = vmatpush1.msra.mxu0 %v322
        %1000 = vmatprep.subr.mxu0 0.0
        %1001 = vmatpush1.msra.mxu0 %v321
        %1002 = vmatprep.subr.mxu0 0.0
        %1003 = vmatpush1.msra.mxu0 %v320
        %1004 = vmatprep.subr.mxu0 0.0
        %1005 = vmatpush1.msra.mxu0 %v319
        %1006 = vmatprep.subr.mxu0 0.0
        %1007 = vmatpush1.msra.mxu0 %v318
        %1008 = vmatprep.subr.mxu0 0.0
        %1009 = vmatpush1.msra.mxu0 %v317
        %1010 = vmatprep.subr.mxu0 0.0
        %1011 = vmatpush1.msra.mxu0 %v316
        %1012 = vmatprep.subr.mxu0 0.0
        %1013 = vmatpush1.msra.mxu0 %v315
        %1014 = vmatprep.subr.mxu0 0.0
        %1015 = vmatpush1.msra.mxu0 %v314
        %1016 = vmatprep.subr.mxu0 0.0
        %1017 = vmatpush1.msra.mxu0 %v313
        %1018 = vmatprep.subr.mxu0 0.0
        %1019 = vmatpush1.msra.mxu0 %v312
        %1020 = vmatprep.subr.mxu0 0.0
        %1021 = vmatpush1.msra.mxu0 %v311
        %1022 = vmatprep.subr.mxu0 0.0
        %1023 = vmatpush2.msra.mxu0 0.0
        %1024 = vmatprep.subr.mxu0 0.0
        %1025 = vmatpush2.msra.mxu0 0.0
        %1026 = vmatprep.subr.mxu0 0.0
        %1027 = vmatpush2.msra.mxu0 0.0
        %1028 = vmatprep.subr.mxu0 0.0
        %1029 = vmatpush2.msra.mxu0 0.0
        %1030 = vmatprep.subr.mxu0 0.0
        %1031 = vmatpush2.msra.mxu0 0.0
        %1032 = vmatprep.subr.mxu0 0.0
        %1033 = vmatpush2.msra.mxu0 0.0
        %1034 = vmatprep.subr.mxu0 0.0
        %1035 = vmatpush2.msra.mxu0 0.0
        %1036 = vmatprep.subr.mxu0 0.0
        %1037 = vmatpush2.msra.mxu0 0.0
        %1038 = vmatprep.subr.mxu0 0.0
        %1039 = vmatpush2.msra.mxu0 0.0
        %1040 = vmatprep.subr.mxu0 0.0
        %1041 = vmatpush2.msra.mxu0 0.0
        %1042 = vmatprep.subr.mxu0 0.0
        %1043 = vmatpush2.msra.mxu0 0.0
        %1044 = vmatprep.subr.mxu0 0.0
        %1045 = vmatpush2.msra.mxu0 0.0
        %1046 = vmatprep.subr.mxu0 0.0
        %1047 = vmatpush2.msra.mxu0 0.0
        %1048 = vmatprep.subr.mxu0 0.0
        %1049 = vmatpush2.msra.mxu0 0.0
        %1050 = vmatprep.subr.mxu0 0.0
        %1051 = vmatpush2.msra.mxu0 0.0
        %1052 = vmatprep.subr.mxu0 0.0
        %1053 = vmatpush2.msra.mxu0 0.0
        %1054 = vmatprep.mubr.f32.mxu0 0.0
        %v1055 = vand.u32 %v363, 4294901760
        %1056 = vmatmul.mubr.f32.gmra.mxu0 %v1055
        %v1057 = vpop.f32.mrf.mxu0
        %v1058 = vadd.f32 %v963, %v1057
        %v1059 = vpop.f32.mrf.mxu0
        %1060 = vmatprep.mubr.f32.mxu0 0.0
        %v1061 = vand.u32 %v364, 4294901760
        %1062 = vmatmul.mubr.f32.gmra.mxu0 %v1061
        %v1063 = vpop.f32.mrf.mxu0
        %v1064 = vadd.f32 %v969, %v1063
        %v1065 = vpop.f32.mrf.mxu0
        %1066 = vmatprep.mubr.f32.mxu0 0.0
        %v1067 = vand.u32 %v365, 4294901760
        %1068 = vmatmul.mubr.f32.gmra.mxu0 %v1067
        %v1069 = vpop.f32.mrf.mxu0
        %v1070 = vadd.f32 %v975, %v1069
        %v1071 = vpop.f32.mrf.mxu0
        %1072 = vmatprep.mubr.f32.mxu0 0.0
        %v1073 = vand.u32 %v366, 4294901760
        %1074 = vmatmul.mubr.f32.gmra.mxu0 %v1073
        %v1075 = vpop.f32.mrf.mxu0
        %v1076 = vadd.f32 %v981, %v1075
        %v1077 = vpop.f32.mrf.mxu0
        %1078 = vmatprep.mubr.f32.mxu0 0.0
        %v1079 = vand.u32 %v367, 4294901760
        %1080 = vmatmul.mubr.f32.gmra.mxu0 %v1079
        %v1081 = vpop.f32.mrf.mxu0
        %v1082 = vadd.f32 %v987, %v1081
        %v1083 = vpop.f32.mrf.mxu0
        %1084 = vdwg.mxu0
        %v1085 = vld [vmem:[#allocation8] sm:$0xff]
        %v1086 = vld [vmem:[#allocation8 + $0x8] sm:$0xff]
        %v1087 = vld [vmem:[#allocation8 + $0x10] sm:$0xff]
        %v1088 = vld [vmem:[#allocation8 + $0x18] sm:$0xff]
        %v1089 = vld [vmem:[#allocation8 + $0x20] sm:$0xff]
        %1090 = vmatprep.subr.mxu0 0.0
        %1091 = vmatpush1.msra.mxu0 %v362
        %1092 = vmatprep.subr.mxu0 0.0
        %1093 = vmatpush1.msra.mxu0 %v361
        %1094 = vmatprep.subr.mxu0 0.0
        %1095 = vmatpush1.msra.mxu0 %v360
        %1096 = vmatprep.subr.mxu0 0.0
        %1097 = vmatpush1.msra.mxu0 %v359
        %1098 = vmatprep.subr.mxu0 0.0
        %1099 = vmatpush1.msra.mxu0 %v358
        %1100 = vmatprep.subr.mxu0 0.0
        %1101 = vmatpush1.msra.mxu0 %v357
        %1102 = vmatprep.subr.mxu0 0.0
        %1103 = vmatpush1.msra.mxu0 %v356
        %1104 = vmatprep.subr.mxu0 0.0
        %1105 = vmatpush1.msra.mxu0 %v355
        %1106 = vmatprep.subr.mxu0 0.0
        %1107 = vmatpush1.msra.mxu0 %v354
        %1108 = vmatprep.subr.mxu0 0.0
        %1109 = vmatpush1.msra.mxu0 %v353
        %1110 = vmatprep.subr.mxu0 0.0
        %1111 = vmatpush1.msra.mxu0 %v352
        %1112 = vmatprep.subr.mxu0 0.0
        %1113 = vmatpush1.msra.mxu0 %v351
        %1114 = vmatprep.subr.mxu0 0.0
        %1115 = vmatpush1.msra.mxu0 %v350
        %1116 = vmatprep.subr.mxu0 0.0
        %1117 = vmatpush1.msra.mxu0 %v349
        %1118 = vmatprep.subr.mxu0 0.0
        %1119 = vmatpush1.msra.mxu0 %v348
        %1120 = vmatprep.subr.mxu0 0.0
        %1121 = vmatpush1.msra.mxu0 %v347
        %1122 = vmatprep.subr.mxu0 0.0
        %1123 = vmatpush2.msra.mxu0 0.0
        %1124 = vmatprep.subr.mxu0 0.0
        %1125 = vmatpush2.msra.mxu0 0.0
        %1126 = vmatprep.subr.mxu0 0.0
        %1127 = vmatpush2.msra.mxu0 0.0
        %1128 = vmatprep.subr.mxu0 0.0
        %1129 = vmatpush2.msra.mxu0 0.0
        %1130 = vmatprep.subr.mxu0 0.0
        %1131 = vmatpush2.msra.mxu0 0.0
        %1132 = vmatprep.subr.mxu0 0.0
        %1133 = vmatpush2.msra.mxu0 0.0
        %1134 = vmatprep.subr.mxu0 0.0
        %1135 = vmatpush2.msra.mxu0 0.0
        %1136 = vmatprep.subr.mxu0 0.0
        %1137 = vmatpush2.msra.mxu0 0.0
        %1138 = vmatprep.subr.mxu0 0.0
        %1139 = vmatpush2.msra.mxu0 0.0
        %1140 = vmatprep.subr.mxu0 0.0
        %1141 = vmatpush2.msra.mxu0 0.0
        %1142 = vmatprep.subr.mxu0 0.0
        %1143 = vmatpush2.msra.mxu0 0.0
        %1144 = vmatprep.subr.mxu0 0.0
        %1145 = vmatpush2.msra.mxu0 0.0
        %1146 = vmatprep.subr.mxu0 0.0
        %1147 = vmatpush2.msra.mxu0 0.0
        %1148 = vmatprep.subr.mxu0 0.0
        %1149 = vmatpush2.msra.mxu0 0.0
        %1150 = vmatprep.subr.mxu0 0.0
        %1151 = vmatpush2.msra.mxu0 0.0
        %1152 = vmatprep.subr.mxu0 0.0
        %1153 = vmatpush2.msra.mxu0 0.0
        %1154 = vmatprep.mubr.f32.mxu0 0.0
        %v1155 = vand.u32 %v1085, 4294901760
        %v1156 = vsub.f32 %v1085, %v1155
        %v1157 = vand.u32 %v1156, 4294901760
        %v1158 = vsub.f32 %v1156, %v1157
        %v1159 = vand.u32 %v1158, 4294901760
        %1160 = vmatmul.mubr.f32.gmra.mxu0 %v1159
        %v1161 = vpop.f32.mrf.mxu0
        %v1162 = vadd.f32 0.0, %v1161
        %v1163 = vpop.f32.mrf.mxu0
        %1164 = vmatprep.mubr.f32.mxu0 0.0
        %v1165 = vand.u32 %v1086, 4294901760
        %v1166 = vsub.f32 %v1086, %v1165
        %v1167 = vand.u32 %v1166, 4294901760
        %v1168 = vsub.f32 %v1166, %v1167
        %v1169 = vand.u32 %v1168, 4294901760
        %1170 = vmatmul.mubr.f32.gmra.mxu0 %v1169
        %v1171 = vpop.f32.mrf.mxu0
        %v1172 = vadd.f32 0.0, %v1171
        %v1173 = vpop.f32.mrf.mxu0
        %1174 = vmatprep.mubr.f32.mxu0 0.0
        %v1175 = vand.u32 %v1087, 4294901760
        %v1176 = vsub.f32 %v1087, %v1175
        %v1177 = vand.u32 %v1176, 4294901760
        %v1178 = vsub.f32 %v1176, %v1177
        %v1179 = vand.u32 %v1178, 4294901760
        %1180 = vmatmul.mubr.f32.gmra.mxu0 %v1179
        %v1181 = vpop.f32.mrf.mxu0
        %v1182 = vadd.f32 0.0, %v1181
        %v1183 = vpop.f32.mrf.mxu0
        %1184 = vmatprep.mubr.f32.mxu0 0.0
        %v1185 = vand.u32 %v1088, 4294901760
        %v1186 = vsub.f32 %v1088, %v1185
        %v1187 = vand.u32 %v1186, 4294901760
        %v1188 = vsub.f32 %v1186, %v1187
        %v1189 = vand.u32 %v1188, 4294901760
        %1190 = vmatmul.mubr.f32.gmra.mxu0 %v1189
        %v1191 = vpop.f32.mrf.mxu0
        %v1192 = vadd.f32 0.0, %v1191
        %v1193 = vpop.f32.mrf.mxu0
        %1194 = vmatprep.mubr.f32.mxu0 0.0
        %v1195 = vand.u32 %v1089, 4294901760
        %v1196 = vsub.f32 %v1089, %v1195
        %v1197 = vand.u32 %v1196, 4294901760
        %v1198 = vsub.f32 %v1196, %v1197
        %v1199 = vand.u32 %v1198, 4294901760
        %1200 = vmatmul.mubr.f32.gmra.mxu0 %v1199
        %v1201 = vpop.f32.mrf.mxu0
        %v1202 = vadd.f32 0.0, %v1201
        %v1203 = vpop.f32.mrf.mxu0
        %1204 = vdwg.mxu0
        %1205 = vmatprep.subr.mxu0 0.0
        %v1206 = vsub.f32 %v362, %v362
        %v1207 = vand.u32 %v1206, 4294901760
        %v1208 = vsub.f32 %v1206, %v1207
        %v1209 = vand.u32 %v1208, 4294901760
        %1210 = vmatpush1.msra.mxu0 %v1209
        %1211 = vmatprep.subr.mxu0 0.0
        %v1212 = vsub.f32 %v361, %v361
        %v1213 = vand.u32 %v1212, 4294901760
        %v1214 = vsub.f32 %v1212, %v1213
        %v1215 = vand.u32 %v1214, 4294901760
        %1216 = vmatpush1.msra.mxu0 %v1215
        %1217 = vmatprep.subr.mxu0 0.0
        %v1218 = vsub.f32 %v360, %v360
        %v1219 = vand.u32 %v1218, 4294901760
        %v1220 = vsub.f32 %v1218, %v1219
        %v1221 = vand.u32 %v1220, 4294901760
        %1222 = vmatpush1.msra.mxu0 %v1221
        %1223 = vmatprep.subr.mxu0 0.0
        %v1224 = vsub.f32 %v359, %v359
        %v1225 = vand.u32 %v1224, 4294901760
        %v1226 = vsub.f32 %v1224, %v1225
        %v1227 = vand.u32 %v1226, 4294901760
        %1228 = vmatpush1.msra.mxu0 %v1227
        %1229 = vmatprep.subr.mxu0 0.0
        %v1230 = vsub.f32 %v358, %v358
        %v1231 = vand.u32 %v1230, 4294901760
        %v1232 = vsub.f32 %v1230, %v1231
        %v1233 = vand.u32 %v1232, 4294901760
        %1234 = vmatpush1.msra.mxu0 %v1233
        %1235 = vmatprep.subr.mxu0 0.0
        %v1236 = vsub.f32 %v357, %v357
        %v1237 = vand.u32 %v1236, 4294901760
        %v1238 = vsub.f32 %v1236, %v1237
        %v1239 = vand.u32 %v1238, 4294901760
        %1240 = vmatpush1.msra.mxu0 %v1239
        %1241 = vmatprep.subr.mxu0 0.0
        %v1242 = vsub.f32 %v356, %v356
        %v1243 = vand.u32 %v1242, 4294901760
        %v1244 = vsub.f32 %v1242, %v1243
        %v1245 = vand.u32 %v1244, 4294901760
        %1246 = vmatpush1.msra.mxu0 %v1245
        %1247 = vmatprep.subr.mxu0 0.0
        %v1248 = vsub.f32 %v355, %v355
        %v1249 = vand.u32 %v1248, 4294901760
        %v1250 = vsub.f32 %v1248, %v1249
        %v1251 = vand.u32 %v1250, 4294901760
        %1252 = vmatpush1.msra.mxu0 %v1251
        %1253 = vmatprep.subr.mxu0 0.0
        %v1254 = vsub.f32 %v354, %v354
        %v1255 = vand.u32 %v1254, 4294901760
        %v1256 = vsub.f32 %v1254, %v1255
        %v1257 = vand.u32 %v1256, 4294901760
        %1258 = vmatpush1.msra.mxu0 %v1257
        %1259 = vmatprep.subr.mxu0 0.0
        %v1260 = vsub.f32 %v353, %v353
        %v1261 = vand.u32 %v1260, 4294901760
        %v1262 = vsub.f32 %v1260, %v1261
        %v1263 = vand.u32 %v1262, 4294901760
        %1264 = vmatpush1.msra.mxu0 %v1263
        %1265 = vmatprep.subr.mxu0 0.0
        %v1266 = vsub.f32 %v352, %v352
        %v1267 = vand.u32 %v1266, 4294901760
        %v1268 = vsub.f32 %v1266, %v1267
        %v1269 = vand.u32 %v1268, 4294901760
        %1270 = vmatpush1.msra.mxu0 %v1269
        %1271 = vmatprep.subr.mxu0 0.0
        %v1272 = vsub.f32 %v351, %v351
        %v1273 = vand.u32 %v1272, 4294901760
        %v1274 = vsub.f32 %v1272, %v1273
        %v1275 = vand.u32 %v1274, 4294901760
        %1276 = vmatpush1.msra.mxu0 %v1275
        %1277 = vmatprep.subr.mxu0 0.0
        %v1278 = vsub.f32 %v350, %v350
        %v1279 = vand.u32 %v1278, 4294901760
        %v1280 = vsub.f32 %v1278, %v1279
        %v1281 = vand.u32 %v1280, 4294901760
        %1282 = vmatpush1.msra.mxu0 %v1281
        %1283 = vmatprep.subr.mxu0 0.0
        %v1284 = vsub.f32 %v349, %v349
        %v1285 = vand.u32 %v1284, 4294901760
        %v1286 = vsub.f32 %v1284, %v1285
        %v1287 = vand.u32 %v1286, 4294901760
        %1288 = vmatpush1.msra.mxu0 %v1287
        %1289 = vmatprep.subr.mxu0 0.0
        %v1290 = vsub.f32 %v348, %v348
        %v1291 = vand.u32 %v1290, 4294901760
        %v1292 = vsub.f32 %v1290, %v1291
        %v1293 = vand.u32 %v1292, 4294901760
        %1294 = vmatpush1.msra.mxu0 %v1293
        %1295 = vmatprep.subr.mxu0 0.0
        %v1296 = vsub.f32 %v347, %v347
        %v1297 = vand.u32 %v1296, 4294901760
        %v1298 = vsub.f32 %v1296, %v1297
        %v1299 = vand.u32 %v1298, 4294901760
        %1300 = vmatpush1.msra.mxu0 %v1299
        %1301 = vmatprep.subr.mxu0 0.0
        %1302 = vmatpush2.msra.mxu0 0.0
        %1303 = vmatprep.subr.mxu0 0.0
        %1304 = vmatpush2.msra.mxu0 0.0
        %1305 = vmatprep.subr.mxu0 0.0
        %1306 = vmatpush2.msra.mxu0 0.0
        %1307 = vmatprep.subr.mxu0 0.0
        %1308 = vmatpush2.msra.mxu0 0.0
        %1309 = vmatprep.subr.mxu0 0.0
        %1310 = vmatpush2.msra.mxu0 0.0
        %1311 = vmatprep.subr.mxu0 0.0
        %1312 = vmatpush2.msra.mxu0 0.0
        %1313 = vmatprep.subr.mxu0 0.0
        %1314 = vmatpush2.msra.mxu0 0.0
        %1315 = vmatprep.subr.mxu0 0.0
        %1316 = vmatpush2.msra.mxu0 0.0
        %1317 = vmatprep.subr.mxu0 0.0
        %1318 = vmatpush2.msra.mxu0 0.0
        %1319 = vmatprep.subr.mxu0 0.0
        %1320 = vmatpush2.msra.mxu0 0.0
        %1321 = vmatprep.subr.mxu0 0.0
        %1322 = vmatpush2.msra.mxu0 0.0
        %1323 = vmatprep.subr.mxu0 0.0
        %1324 = vmatpush2.msra.mxu0 0.0
        %1325 = vmatprep.subr.mxu0 0.0
        %1326 = vmatpush2.msra.mxu0 0.0
        %1327 = vmatprep.subr.mxu0 0.0
        %1328 = vmatpush2.msra.mxu0 0.0
        %1329 = vmatprep.subr.mxu0 0.0
        %1330 = vmatpush2.msra.mxu0 0.0
        %1331 = vmatprep.subr.mxu0 0.0
        %1332 = vmatpush2.msra.mxu0 0.0
        %1333 = vmatprep.mubr.f32.mxu0 0.0
        %v1334 = vand.u32 %v1085, 4294901760
        %1335 = vmatmul.mubr.f32.gmra.mxu0 %v1334
        %v1336 = vpop.f32.mrf.mxu0
        %v1337 = vadd.f32 %v1162, %v1336
        %v1338 = vpop.f32.mrf.mxu0
        %1339 = vmatprep.mubr.f32.mxu0 0.0
        %v1340 = vand.u32 %v1086, 4294901760
        %1341 = vmatmul.mubr.f32.gmra.mxu0 %v1340
        %v1342 = vpop.f32.mrf.mxu0
        %v1343 = vadd.f32 %v1172, %v1342
        %v1344 = vpop.f32.mrf.mxu0
        %1345 = vmatprep.mubr.f32.mxu0 0.0
        %v1346 = vand.u32 %v1087, 4294901760
        %1347 = vmatmul.mubr.f32.gmra.mxu0 %v1346
        %v1348 = vpop.f32.mrf.mxu0
        %v1349 = vadd.f32 %v1182, %v1348
        %v1350 = vpop.f32.mrf.mxu0
        %1351 = vmatprep.mubr.f32.mxu0 0.0
        %v1352 = vand.u32 %v1088, 4294901760
        %1353 = vmatmul.mubr.f32.gmra.mxu0 %v1352
        %v1354 = vpop.f32.mrf.mxu0
        %v1355 = vadd.f32 %v1192, %v1354
        %v1356 = vpop.f32.mrf.mxu0
        %1357 = vmatprep.mubr.f32.mxu0 0.0
        %v1358 = vand.u32 %v1089, 4294901760
        %1359 = vmatmul.mubr.f32.gmra.mxu0 %v1358
        %v1360 = vpop.f32.mrf.mxu0
        %v1361 = vadd.f32 %v1202, %v1360
        %v1362 = vpop.f32.mrf.mxu0
        %1363 = vdwg.mxu0
        %1364 = vmatprep.subr.mxu0 0.0
        %v1365 = vsub.f32 %v362, %v362
        %1366 = vmatpush1.msra.mxu0 %v1365
        %1367 = vmatprep.subr.mxu0 0.0
        %v1368 = vsub.f32 %v361, %v361
        %1369 = vmatpush1.msra.mxu0 %v1368
        %1370 = vmatprep.subr.mxu0 0.0
        %v1371 = vsub.f32 %v360, %v360
        %1372 = vmatpush1.msra.mxu0 %v1371
        %1373 = vmatprep.subr.mxu0 0.0
        %v1374 = vsub.f32 %v359, %v359
        %1375 = vmatpush1.msra.mxu0 %v1374
        %1376 = vmatprep.subr.mxu0 0.0
        %v1377 = vsub.f32 %v358, %v358
        %1378 = vmatpush1.msra.mxu0 %v1377
        %1379 = vmatprep.subr.mxu0 0.0
        %v1380 = vsub.f32 %v357, %v357
        %1381 = vmatpush1.msra.mxu0 %v1380
        %1382 = vmatprep.subr.mxu0 0.0
        %v1383 = vsub.f32 %v356, %v356
        %1384 = vmatpush1.msra.mxu0 %v1383
        %1385 = vmatprep.subr.mxu0 0.0
        %v1386 = vsub.f32 %v355, %v355
        %1387 = vmatpush1.msra.mxu0 %v1386
        %1388 = vmatprep.subr.mxu0 0.0
        %v1389 = vsub.f32 %v354, %v354
        %1390 = vmatpush1.msra.mxu0 %v1389
        %1391 = vmatprep.subr.mxu0 0.0
        %v1392 = vsub.f32 %v353, %v353
        %1393 = vmatpush1.msra.mxu0 %v1392
        %1394 = vmatprep.subr.mxu0 0.0
        %v1395 = vsub.f32 %v352, %v352
        %1396 = vmatpush1.msra.mxu0 %v1395
        %1397 = vmatprep.subr.mxu0 0.0
        %v1398 = vsub.f32 %v351, %v351
        %1399 = vmatpush1.msra.mxu0 %v1398
        %1400 = vmatprep.subr.mxu0 0.0
        %v1401 = vsub.f32 %v350, %v350
        %1402 = vmatpush1.msra.mxu0 %v1401
        %1403 = vmatprep.subr.mxu0 0.0
        %v1404 = vsub.f32 %v349, %v349
        %1405 = vmatpush1.msra.mxu0 %v1404
        %1406 = vmatprep.subr.mxu0 0.0
        %v1407 = vsub.f32 %v348, %v348
        %1408 = vmatpush1.msra.mxu0 %v1407
        %1409 = vmatprep.subr.mxu0 0.0
        %v1410 = vsub.f32 %v347, %v347
        %1411 = vmatpush1.msra.mxu0 %v1410
        %1412 = vmatprep.subr.mxu0 0.0
        %1413 = vmatpush2.msra.mxu0 0.0
        %1414 = vmatprep.subr.mxu0 0.0
        %1415 = vmatpush2.msra.mxu0 0.0
        %1416 = vmatprep.subr.mxu0 0.0
        %1417 = vmatpush2.msra.mxu0 0.0
        %1418 = vmatprep.subr.mxu0 0.0
        %1419 = vmatpush2.msra.mxu0 0.0
        %1420 = vmatprep.subr.mxu0 0.0
        %1421 = vmatpush2.msra.mxu0 0.0
        %1422 = vmatprep.subr.mxu0 0.0
        %1423 = vmatpush2.msra.mxu0 0.0
        %1424 = vmatprep.subr.mxu0 0.0
        %1425 = vmatpush2.msra.mxu0 0.0
        %1426 = vmatprep.subr.mxu0 0.0
        %1427 = vmatpush2.msra.mxu0 0.0
        %1428 = vmatprep.subr.mxu0 0.0
        %1429 = vmatpush2.msra.mxu0 0.0
        %1430 = vmatprep.subr.mxu0 0.0
        %1431 = vmatpush2.msra.mxu0 0.0
        %1432 = vmatprep.subr.mxu0 0.0
        %1433 = vmatpush2.msra.mxu0 0.0
        %1434 = vmatprep.subr.mxu0 0.0
        %1435 = vmatpush2.msra.mxu0 0.0
        %1436 = vmatprep.subr.mxu0 0.0
        %1437 = vmatpush2.msra.mxu0 0.0
        %1438 = vmatprep.subr.mxu0 0.0
        %1439 = vmatpush2.msra.mxu0 0.0
        %1440 = vmatprep.subr.mxu0 0.0
        %1441 = vmatpush2.msra.mxu0 0.0
        %1442 = vmatprep.subr.mxu0 0.0
        %1443 = vmatpush2.msra.mxu0 0.0
        %1444 = vmatprep.mubr.f32.mxu0 0.0
        %v1445 = vand.u32 %v1085, 4294901760
        %v1446 = vsub.f32 %v1085, %v1445
        %1447 = vmatmul.mubr.f32.gmra.mxu0 %v1446
        %v1448 = vpop.f32.mrf.mxu0
        %v1449 = vadd.f32 %v1337, %v1448
        %v1450 = vpop.f32.mrf.mxu0
        %1451 = vmatprep.mubr.f32.mxu0 0.0
        %v1452 = vand.u32 %v1086, 4294901760
        %v1453 = vsub.f32 %v1086, %v1452
        %1454 = vmatmul.mubr.f32.gmra.mxu0 %v1453
        %v1455 = vpop.f32.mrf.mxu0
        %v1456 = vadd.f32 %v1343, %v1455
        %v1457 = vpop.f32.mrf.mxu0
        %1458 = vmatprep.mubr.f32.mxu0 0.0
        %v1459 = vand.u32 %v1087, 4294901760
        %v1460 = vsub.f32 %v1087, %v1459
        %1461 = vmatmul.mubr.f32.gmra.mxu0 %v1460
        %v1462 = vpop.f32.mrf.mxu0
        %v1463 = vadd.f32 %v1349, %v1462
        %v1464 = vpop.f32.mrf.mxu0
        %1465 = vmatprep.mubr.f32.mxu0 0.0
        %v1466 = vand.u32 %v1088, 4294901760
        %v1467 = vsub.f32 %v1088, %v1466
        %1468 = vmatmul.mubr.f32.gmra.mxu0 %v1467
        %v1469 = vpop.f32.mrf.mxu0
        %v1470 = vadd.f32 %v1355, %v1469
        %v1471 = vpop.f32.mrf.mxu0
        %1472 = vmatprep.mubr.f32.mxu0 0.0
        %v1473 = vand.u32 %v1089, 4294901760
        %v1474 = vsub.f32 %v1089, %v1473
        %1475 = vmatmul.mubr.f32.gmra.mxu0 %v1474
        %v1476 = vpop.f32.mrf.mxu0
        %v1477 = vadd.f32 %v1361, %v1476
        %v1478 = vpop.f32.mrf.mxu0
        %1479 = vdwg.mxu0
        %1480 = vmatprep.subr.mxu0 0.0
        %1481 = vmatpush1.msra.mxu0 %v362
        %1482 = vmatprep.subr.mxu0 0.0
        %1483 = vmatpush1.msra.mxu0 %v361
        %1484 = vmatprep.subr.mxu0 0.0
        %1485 = vmatpush1.msra.mxu0 %v360
        %1486 = vmatprep.subr.mxu0 0.0
        %1487 = vmatpush1.msra.mxu0 %v359
        %1488 = vmatprep.subr.mxu0 0.0
        %1489 = vmatpush1.msra.mxu0 %v358
        %1490 = vmatprep.subr.mxu0 0.0
        %1491 = vmatpush1.msra.mxu0 %v357
        %1492 = vmatprep.subr.mxu0 0.0
        %1493 = vmatpush1.msra.mxu0 %v356
        %1494 = vmatprep.subr.mxu0 0.0
        %1495 = vmatpush1.msra.mxu0 %v355
        %1496 = vmatprep.subr.mxu0 0.0
        %1497 = vmatpush1.msra.mxu0 %v354
        %1498 = vmatprep.subr.mxu0 0.0
        %1499 = vmatpush1.msra.mxu0 %v353
        %1500 = vmatprep.subr.mxu0 0.0
        %1501 = vmatpush1.msra.mxu0 %v352
        %1502 = vmatprep.subr.mxu0 0.0
        %1503 = vmatpush1.msra.mxu0 %v351
        %1504 = vmatprep.subr.mxu0 0.0
        %1505 = vmatpush1.msra.mxu0 %v350
        %1506 = vmatprep.subr.mxu0 0.0
        %1507 = vmatpush1.msra.mxu0 %v349
        %1508 = vmatprep.subr.mxu0 0.0
        %1509 = vmatpush1.msra.mxu0 %v348
        %1510 = vmatprep.subr.mxu0 0.0
        %1511 = vmatpush1.msra.mxu0 %v347
        %1512 = vmatprep.subr.mxu0 0.0
        %1513 = vmatpush2.msra.mxu0 0.0
        %1514 = vmatprep.subr.mxu0 0.0
        %1515 = vmatpush2.msra.mxu0 0.0
        %1516 = vmatprep.subr.mxu0 0.0
        %1517 = vmatpush2.msra.mxu0 0.0
        %1518 = vmatprep.subr.mxu0 0.0
        %1519 = vmatpush2.msra.mxu0 0.0
        %1520 = vmatprep.subr.mxu0 0.0
        %1521 = vmatpush2.msra.mxu0 0.0
        %1522 = vmatprep.subr.mxu0 0.0
        %1523 = vmatpush2.msra.mxu0 0.0
        %1524 = vmatprep.subr.mxu0 0.0
        %1525 = vmatpush2.msra.mxu0 0.0
        %1526 = vmatprep.subr.mxu0 0.0
        %1527 = vmatpush2.msra.mxu0 0.0
        %1528 = vmatprep.subr.mxu0 0.0
        %1529 = vmatpush2.msra.mxu0 0.0
        %1530 = vmatprep.subr.mxu0 0.0
        %1531 = vmatpush2.msra.mxu0 0.0
        %1532 = vmatprep.subr.mxu0 0.0
        %1533 = vmatpush2.msra.mxu0 0.0
        %1534 = vmatprep.subr.mxu0 0.0
        %1535 = vmatpush2.msra.mxu0 0.0
        %1536 = vmatprep.subr.mxu0 0.0
        %1537 = vmatpush2.msra.mxu0 0.0
        %1538 = vmatprep.subr.mxu0 0.0
        %1539 = vmatpush2.msra.mxu0 0.0
        %1540 = vmatprep.subr.mxu0 0.0
        %1541 = vmatpush2.msra.mxu0 0.0
        %1542 = vmatprep.subr.mxu0 0.0
        %1543 = vmatpush2.msra.mxu0 0.0
        %1544 = vmatprep.mubr.f32.mxu0 0.0
        %v1545 = vand.u32 %v1085, 4294901760
        %v1546 = vsub.f32 %v1085, %v1545
        %v1547 = vand.u32 %v1546, 4294901760
        %1548 = vmatmul.mubr.f32.gmra.mxu0 %v1547
        %v1549 = vpop.f32.mrf.mxu0
        %v1550 = vadd.f32 %v1449, %v1549
        %v1551 = vpop.f32.mrf.mxu0
        %1552 = vmatprep.mubr.f32.mxu0 0.0
        %v1553 = vand.u32 %v1086, 4294901760
        %v1554 = vsub.f32 %v1086, %v1553
        %v1555 = vand.u32 %v1554, 4294901760
        %1556 = vmatmul.mubr.f32.gmra.mxu0 %v1555
        %v1557 = vpop.f32.mrf.mxu0
        %v1558 = vadd.f32 %v1456, %v1557
        %v1559 = vpop.f32.mrf.mxu0
        %1560 = vmatprep.mubr.f32.mxu0 0.0
        %v1561 = vand.u32 %v1087, 4294901760
        %v1562 = vsub.f32 %v1087, %v1561
        %v1563 = vand.u32 %v1562, 4294901760
        %1564 = vmatmul.mubr.f32.gmra.mxu0 %v1563
        %v1565 = vpop.f32.mrf.mxu0
        %v1566 = vadd.f32 %v1463, %v1565
        %v1567 = vpop.f32.mrf.mxu0
        %1568 = vmatprep.mubr.f32.mxu0 0.0
        %v1569 = vand.u32 %v1088, 4294901760
        %v1570 = vsub.f32 %v1088, %v1569
        %v1571 = vand.u32 %v1570, 4294901760
        %1572 = vmatmul.mubr.f32.gmra.mxu0 %v1571
        %v1573 = vpop.f32.mrf.mxu0
        %v1574 = vadd.f32 %v1470, %v1573
        %v1575 = vpop.f32.mrf.mxu0
        %1576 = vmatprep.mubr.f32.mxu0 0.0
        %v1577 = vand.u32 %v1089, 4294901760
        %v1578 = vsub.f32 %v1089, %v1577
        %v1579 = vand.u32 %v1578, 4294901760
        %1580 = vmatmul.mubr.f32.gmra.mxu0 %v1579
        %v1581 = vpop.f32.mrf.mxu0
        %v1582 = vadd.f32 %v1477, %v1581
        %v1583 = vpop.f32.mrf.mxu0
        %1584 = vdwg.mxu0
        %1585 = vmatprep.subr.mxu0 0.0
        %v1586 = vsub.f32 %v362, %v362
        %v1587 = vand.u32 %v1586, 4294901760
        %1588 = vmatpush1.msra.mxu0 %v1587
        %1589 = vmatprep.subr.mxu0 0.0
        %v1590 = vsub.f32 %v361, %v361
        %v1591 = vand.u32 %v1590, 4294901760
        %1592 = vmatpush1.msra.mxu0 %v1591
        %1593 = vmatprep.subr.mxu0 0.0
        %v1594 = vsub.f32 %v360, %v360
        %v1595 = vand.u32 %v1594, 4294901760
        %1596 = vmatpush1.msra.mxu0 %v1595
        %1597 = vmatprep.subr.mxu0 0.0
        %v1598 = vsub.f32 %v359, %v359
        %v1599 = vand.u32 %v1598, 4294901760
        %1600 = vmatpush1.msra.mxu0 %v1599
        %1601 = vmatprep.subr.mxu0 0.0
        %v1602 = vsub.f32 %v358, %v358
        %v1603 = vand.u32 %v1602, 4294901760
        %1604 = vmatpush1.msra.mxu0 %v1603
        %1605 = vmatprep.subr.mxu0 0.0
        %v1606 = vsub.f32 %v357, %v357
        %v1607 = vand.u32 %v1606, 4294901760
        %1608 = vmatpush1.msra.mxu0 %v1607
        %1609 = vmatprep.subr.mxu0 0.0
        %v1610 = vsub.f32 %v356, %v356
        %v1611 = vand.u32 %v1610, 4294901760
        %1612 = vmatpush1.msra.mxu0 %v1611
        %1613 = vmatprep.subr.mxu0 0.0
        %v1614 = vsub.f32 %v355, %v355
        %v1615 = vand.u32 %v1614, 4294901760
        %1616 = vmatpush1.msra.mxu0 %v1615
        %1617 = vmatprep.subr.mxu0 0.0
        %v1618 = vsub.f32 %v354, %v354
        %v1619 = vand.u32 %v1618, 4294901760
        %1620 = vmatpush1.msra.mxu0 %v1619
        %1621 = vmatprep.subr.mxu0 0.0
        %v1622 = vsub.f32 %v353, %v353
        %v1623 = vand.u32 %v1622, 4294901760
        %1624 = vmatpush1.msra.mxu0 %v1623
        %1625 = vmatprep.subr.mxu0 0.0
        %v1626 = vsub.f32 %v352, %v352
        %v1627 = vand.u32 %v1626, 4294901760
        %1628 = vmatpush1.msra.mxu0 %v1627
        %1629 = vmatprep.subr.mxu0 0.0
        %v1630 = vsub.f32 %v351, %v351
        %v1631 = vand.u32 %v1630, 4294901760
        %1632 = vmatpush1.msra.mxu0 %v1631
        %1633 = vmatprep.subr.mxu0 0.0
        %v1634 = vsub.f32 %v350, %v350
        %v1635 = vand.u32 %v1634, 4294901760
        %1636 = vmatpush1.msra.mxu0 %v1635
        %1637 = vmatprep.subr.mxu0 0.0
        %v1638 = vsub.f32 %v349, %v349
        %v1639 = vand.u32 %v1638, 4294901760
        %1640 = vmatpush1.msra.mxu0 %v1639
        %1641 = vmatprep.subr.mxu0 0.0
        %v1642 = vsub.f32 %v348, %v348
        %v1643 = vand.u32 %v1642, 4294901760
        %1644 = vmatpush1.msra.mxu0 %v1643
        %1645 = vmatprep.subr.mxu0 0.0
        %v1646 = vsub.f32 %v347, %v347
        %v1647 = vand.u32 %v1646, 4294901760
        %1648 = vmatpush1.msra.mxu0 %v1647
        %1649 = vmatprep.subr.mxu0 0.0
        %1650 = vmatpush2.msra.mxu0 0.0
        %1651 = vmatprep.subr.mxu0 0.0
        %1652 = vmatpush2.msra.mxu0 0.0
        %1653 = vmatprep.subr.mxu0 0.0
        %1654 = vmatpush2.msra.mxu0 0.0
        %1655 = vmatprep.subr.mxu0 0.0
        %1656 = vmatpush2.msra.mxu0 0.0
        %1657 = vmatprep.subr.mxu0 0.0
        %1658 = vmatpush2.msra.mxu0 0.0
        %1659 = vmatprep.subr.mxu0 0.0
        %1660 = vmatpush2.msra.mxu0 0.0
        %1661 = vmatprep.subr.mxu0 0.0
        %1662 = vmatpush2.msra.mxu0 0.0
        %1663 = vmatprep.subr.mxu0 0.0
        %1664 = vmatpush2.msra.mxu0 0.0
        %1665 = vmatprep.subr.mxu0 0.0
        %1666 = vmatpush2.msra.mxu0 0.0
        %1667 = vmatprep.subr.mxu0 0.0
        %1668 = vmatpush2.msra.mxu0 0.0
        %1669 = vmatprep.subr.mxu0 0.0
        %1670 = vmatpush2.msra.mxu0 0.0
        %1671 = vmatprep.subr.mxu0 0.0
        %1672 = vmatpush2.msra.mxu0 0.0
        %1673 = vmatprep.subr.mxu0 0.0
        %1674 = vmatpush2.msra.mxu0 0.0
        %1675 = vmatprep.subr.mxu0 0.0
        %1676 = vmatpush2.msra.mxu0 0.0
        %1677 = vmatprep.subr.mxu0 0.0
        %1678 = vmatpush2.msra.mxu0 0.0
        %1679 = vmatprep.subr.mxu0 0.0
        %1680 = vmatpush2.msra.mxu0 0.0
        %1681 = vmatprep.mubr.f32.mxu0 0.0
        %v1682 = vand.u32 %v1085, 4294901760
        %1683 = vmatmul.mubr.f32.gmra.mxu0 %v1682
        %v1684 = vpop.f32.mrf.mxu0
        %v1685 = vadd.f32 %v1550, %v1684
        %v1686 = vpop.f32.mrf.mxu0
        %1687 = vmatprep.mubr.f32.mxu0 0.0
        %v1688 = vand.u32 %v1086, 4294901760
        %1689 = vmatmul.mubr.f32.gmra.mxu0 %v1688
        %v1690 = vpop.f32.mrf.mxu0
        %v1691 = vadd.f32 %v1558, %v1690
        %v1692 = vpop.f32.mrf.mxu0
        %1693 = vmatprep.mubr.f32.mxu0 0.0
        %v1694 = vand.u32 %v1087, 4294901760
        %1695 = vmatmul.mubr.f32.gmra.mxu0 %v1694
        %v1696 = vpop.f32.mrf.mxu0
        %v1697 = vadd.f32 %v1566, %v1696
        %v1698 = vpop.f32.mrf.mxu0
        %1699 = vmatprep.mubr.f32.mxu0 0.0
        %v1700 = vand.u32 %v1088, 4294901760
        %1701 = vmatmul.mubr.f32.gmra.mxu0 %v1700
        %v1702 = vpop.f32.mrf.mxu0
        %v1703 = vadd.f32 %v1574, %v1702
        %v1704 = vpop.f32.mrf.mxu0
        %1705 = vmatprep.mubr.f32.mxu0 0.0
        %v1706 = vand.u32 %v1089, 4294901760
        %1707 = vmatmul.mubr.f32.gmra.mxu0 %v1706
        %v1708 = vpop.f32.mrf.mxu0
        %v1709 = vadd.f32 %v1582, %v1708
        %v1710 = vpop.f32.mrf.mxu0
        %1711 = vdwg.mxu0
        %1712 = vmatprep.subr.mxu0 0.0
        %1713 = vmatpush1.msra.mxu0 %v362
        %1714 = vmatprep.subr.mxu0 0.0
        %1715 = vmatpush1.msra.mxu0 %v361
        %1716 = vmatprep.subr.mxu0 0.0
        %1717 = vmatpush1.msra.mxu0 %v360
        %1718 = vmatprep.subr.mxu0 0.0
        %1719 = vmatpush1.msra.mxu0 %v359
        %1720 = vmatprep.subr.mxu0 0.0
        %1721 = vmatpush1.msra.mxu0 %v358
        %1722 = vmatprep.subr.mxu0 0.0
        %1723 = vmatpush1.msra.mxu0 %v357
        %1724 = vmatprep.subr.mxu0 0.0
        %1725 = vmatpush1.msra.mxu0 %v356
        %1726 = vmatprep.subr.mxu0 0.0
        %1727 = vmatpush1.msra.mxu0 %v355
        %1728 = vmatprep.subr.mxu0 0.0
        %1729 = vmatpush1.msra.mxu0 %v354
        %1730 = vmatprep.subr.mxu0 0.0
        %1731 = vmatpush1.msra.mxu0 %v353
        %1732 = vmatprep.subr.mxu0 0.0
        %1733 = vmatpush1.msra.mxu0 %v352
        %1734 = vmatprep.subr.mxu0 0.0
        %1735 = vmatpush1.msra.mxu0 %v351
        %1736 = vmatprep.subr.mxu0 0.0
        %1737 = vmatpush1.msra.mxu0 %v350
        %1738 = vmatprep.subr.mxu0 0.0
        %1739 = vmatpush1.msra.mxu0 %v349
        %1740 = vmatprep.subr.mxu0 0.0
        %1741 = vmatpush1.msra.mxu0 %v348
        %1742 = vmatprep.subr.mxu0 0.0
        %1743 = vmatpush1.msra.mxu0 %v347
        %1744 = vmatprep.subr.mxu0 0.0
        %1745 = vmatpush2.msra.mxu0 0.0
        %1746 = vmatprep.subr.mxu0 0.0
        %1747 = vmatpush2.msra.mxu0 0.0
        %1748 = vmatprep.subr.mxu0 0.0
        %1749 = vmatpush2.msra.mxu0 0.0
        %1750 = vmatprep.subr.mxu0 0.0
        %1751 = vmatpush2.msra.mxu0 0.0
        %1752 = vmatprep.subr.mxu0 0.0
        %1753 = vmatpush2.msra.mxu0 0.0
        %1754 = vmatprep.subr.mxu0 0.0
        %1755 = vmatpush2.msra.mxu0 0.0
        %1756 = vmatprep.subr.mxu0 0.0
        %1757 = vmatpush2.msra.mxu0 0.0
        %1758 = vmatprep.subr.mxu0 0.0
        %1759 = vmatpush2.msra.mxu0 0.0
        %1760 = vmatprep.subr.mxu0 0.0
        %1761 = vmatpush2.msra.mxu0 0.0
        %1762 = vmatprep.subr.mxu0 0.0
        %1763 = vmatpush2.msra.mxu0 0.0
        %1764 = vmatprep.subr.mxu0 0.0
        %1765 = vmatpush2.msra.mxu0 0.0
        %1766 = vmatprep.subr.mxu0 0.0
        %1767 = vmatpush2.msra.mxu0 0.0
        %1768 = vmatprep.subr.mxu0 0.0
        %1769 = vmatpush2.msra.mxu0 0.0
        %1770 = vmatprep.subr.mxu0 0.0
        %1771 = vmatpush2.msra.mxu0 0.0
        %1772 = vmatprep.subr.mxu0 0.0
        %1773 = vmatpush2.msra.mxu0 0.0
        %1774 = vmatprep.subr.mxu0 0.0
        %1775 = vmatpush2.msra.mxu0 0.0
        %1776 = vmatprep.mubr.f32.mxu0 0.0
        %v1777 = vand.u32 %v1085, 4294901760
        %1778 = vmatmul.mubr.f32.gmra.mxu0 %v1777
        %v1779 = vpop.f32.mrf.mxu0
        %v1780 = vadd.f32 %v1685, %v1779
        %v1781 = vpop.f32.mrf.mxu0
        %1782 = vmatprep.mubr.f32.mxu0 0.0
        %v1783 = vand.u32 %v1086, 4294901760
        %1784 = vmatmul.mubr.f32.gmra.mxu0 %v1783
        %v1785 = vpop.f32.mrf.mxu0
        %v1786 = vadd.f32 %v1691, %v1785
        %v1787 = vpop.f32.mrf.mxu0
        %1788 = vmatprep.mubr.f32.mxu0 0.0
        %v1789 = vand.u32 %v1087, 4294901760
        %1790 = vmatmul.mubr.f32.gmra.mxu0 %v1789
        %v1791 = vpop.f32.mrf.mxu0
        %v1792 = vadd.f32 %v1697, %v1791
        %v1793 = vpop.f32.mrf.mxu0
        %1794 = vmatprep.mubr.f32.mxu0 0.0
        %v1795 = vand.u32 %v1088, 4294901760
        %1796 = vmatmul.mubr.f32.gmra.mxu0 %v1795
        %v1797 = vpop.f32.mrf.mxu0
        %v1798 = vadd.f32 %v1703, %v1797
        %v1799 = vpop.f32.mrf.mxu0
        %1800 = vmatprep.mubr.f32.mxu0 0.0
        %v1801 = vand.u32 %v1089, 4294901760
        %1802 = vmatmul.mubr.f32.gmra.mxu0 %v1801
        %v1803 = vpop.f32.mrf.mxu0
        %v1804 = vadd.f32 %v1709, %v1803
        %v1805 = vpop.f32.mrf.mxu0
        %1806 = vdwg.mxu0
        %v1807 = vmul.f32 %v1058, %v1780
        %v1808 = vmul.f32 %v1064, %v1786
        %v1809 = vmul.f32 %v1070, %v1792
        %v1810 = vmul.f32 %v1076, %v1798
        %v1811 = vmul.f32 %v1082, %v1804
        %v1812 = vadd.f32 %v1807, %v1808
        %v1813 = vadd.f32 %v1812, %v1809
        %v1814 = vadd.f32 %v1813, %v1810
        %v1815 = vadd.f32 %v1814, %v1811
        %v1816 = vrot.slane %v1815, 4
        %v1817 = vadd.f32 %v1815, %v1816
        %v1818 = vrot.slane %v1817, 2
        %v1819 = vadd.f32 %v1817, %v1818
        %v1820 = vrot.slane %v1819, 1
        %v1821 = vadd.f32 %v1819, %v1820
        %1822 = vst [vmem:[%s271] sm:$0x1] %v1821
        %s1823 = sand.u32 %s127, 1
        %s1824 = scalar_lea.sflag [#allocation4], %s1823
        %s1825 = sand.u32 %s127, 1
        %s1826 = scalar_lea.vmem [#allocation10], %s1825
        // Predicated region
        $region53: #{tpu_custom_call.1} parent=35 // pred_check
          %p1827 = pneg %p137
        $region54: #{tpu_custom_call.1} parent=35 // pred_check_branch
          %1829 = sbr.rel (%p1827) target = $region56
        $region55: #{tpu_custom_call.1} parent=35 // pred_region
          %s1831 = ssub.s32 16, 16
          %1832 = vsyncadd %s1824, %s1831
          %s1833 = smul.addr %s25, 16
          %s1834 = scalar_lea.hbm %s4, %s1833
          %s1836 = sshll.u32 %s1826, 4
          %s1837 = int_to_ptr.vmem [resolvable:$true] %s1836
          %1839 = dma.vmem_to_hbm [thread:$0]  %s1837, 16, %s1834, %s1824
        $region56: #{tpu_custom_call.1} parent=35 // pred_fallthru
          _
      $region36: #{tpu_custom_call.1} parent=5 // pred_fallthru
        _
      %p1840 = scmp.le.s32.totalorder 2, %s20
      // Predicated region
      $region57: #{tpu_custom_call.1} parent=5 // pred_check
        %p1841 = pneg %p1840
      $region58: #{tpu_custom_call.1} parent=5 // pred_check_branch
        %1843 = sbr.rel (%p1841) target = $region60
      $region59: #{tpu_custom_call.1} parent=5 // pred_region
        %s1844 = ssub.s32 %s20, 2
        // Predicated region
        $region61: #{tpu_custom_call.1} parent=59 // pred_check
          %p1845 = pneg %p143
        $region62: #{tpu_custom_call.1} parent=59 // pred_check_branch
          %1847 = sbr.rel (%p1845) target = $region64
        $region63: #{tpu_custom_call.1} parent=59 // pred_region
          %s1848 = sand.u32 %s128, 1
          %s1849 = scalar_lea.sflag [#allocation4], %s1848
          %s1850 = sand.u32 %s128, 1
          %s1851 = scalar_lea.vmem [#allocation10], %s1850
          %1852 = dma.done %s1849, 16
        $region64: #{tpu_custom_call.1} parent=59 // pred_fallthru
          _
      $region60: #{tpu_custom_call.1} parent=5 // pred_fallthru
        _
    $region6: #{tpu_custom_call.1} parent=1 // loop_footer
      %s24 = sadd.s32 1, %s20
    $region7: #{tpu_custom_call.1} parent=1 // loop_footer_branch
      %19 = sbr.rel target = $region3
    $region8: #{tpu_custom_call.1} parent=1 // loop_exit
      _
    %1853 = vsyncpa [#allocation3], 1
    %s1854 = scalar_lea.sflag [#allocation3], 1
    %1855 = vsyncpa %s1854, 1
    %1856 = vsyncpa [#allocation6], 1
    %s1857 = scalar_lea.sflag [#allocation6], 1
    %1858 = vsyncpa %s1857, 1
    %1859 = vsyncpa [#allocation9], 1
    %1860 = vsyncpa [#allocation4], 1
    %s1861 = scalar_lea.sflag [#allocation4], 1
    %1862 = vsyncpa %s1861, 1

</llo_original>
